<compile_context>
chip_gen: v5e
topology: v5e:2x2
jax: 0.10.0
libtpu: 0.0.40
codegen_flags: <defaults>
</compile_context>

<pallas_src>
import jax
import jax.numpy as jnp
from jax.experimental import pallas as pl
from jax.experimental.pallas import tpu as pltpu

_COLS = 512                      # lane-dense last dim: multiple of 128
_TILE_BYTES_MAX = 4 * 1024 * 1024  # per-tile target (4 MiB)
_MIN_PALLAS_ELEMS = 256 * 1024   # below this, plain JAX is faster than a launch

# Minimum sublane multiple per dtype (second-to-last dim alignment).
_SUBLANE = {
    jnp.dtype(jnp.float32): 8,
    jnp.dtype(jnp.bfloat16): 16,
    jnp.dtype(jnp.float16): 16,
}


def _affine_kernel(params_ref, x_ref, loc_ref):
    # params_ref lives in SMEM: [alpha, beta] as f32 scalars.
    alpha = params_ref[0]
    beta = params_ref[1]
    # Elementwise affine on the VPU; compute in f32, store in the I/O dtype.
    x = x_ref[...].astype(jnp.float32)
    loc_ref[...] = (alpha * x + beta).astype(loc_ref.dtype)


def _round_up(v, m):
    return ((v + m - 1) // m) * m


def _pick_tile_m(rows, sub, tmax):
    """Pick tile rows (multiple of `sub`, <= tmax). `rows` is a multiple of `sub`."""
    if rows <= tmax:
        # Whole array fits in one tile.  Split into 2 full tiles when large
        # enough so v7x's two TensorCores both get work (harmless elsewhere).
        if rows > tmax // 2 and rows % (2 * sub) == 0:
            return rows // 2
        return rows
    # Many steps: prefer the largest tile <= tmax that evenly divides rows
    # (keeps every store an unmasked full-lane vst).
    lo = max(sub, tmax // 8)
    for cand in range(tmax, lo - 1, -sub):
        if rows % cand == 0:
            return cand
    # Rare pathological row count: accept a partial trailing block (Pallas
    # masks the out-of-bounds writes) rather than an extra pad+slice HBM pass.
    return tmax


def linear_normal_forward(alpha, beta, s, x):
    """Forward pass of LinearNormal.

    alpha, beta, s: scalar parameters; x: array of any shape.
    Returns (loc, scale): loc has x's shape/dtype, scale is a f32 scalar.
    These are the parameters of Normal(loc, scale).
    """
    alpha = jnp.asarray(alpha, jnp.float32)
    beta = jnp.asarray(beta, jnp.float32)
    s = jnp.asarray(s, jnp.float32)

    # Numerically stable softplus (== log(1 + exp(s)) without overflow).
    scale = jax.nn.softplus(s)

    orig_shape = x.shape
    if jnp.dtype(x.dtype) not in _SUBLANE:
        x = x.astype(jnp.float32)          # ints / f64 -> f32 (torch promotes too)
    dt = jnp.dtype(x.dtype)
    n = x.size

    if n == 0:
        return jnp.zeros(orig_shape, dt), scale

    # Tiny inputs: launching a Pallas kernel costs more than the work.
    if n < _MIN_PALLAS_ELEMS:
        loc = (alpha * x.astype(jnp.float32) + beta).astype(dt)
        return loc.reshape(orig_shape), scale

    itemsize = dt.itemsize
    sub = _SUBLANE[dt]
    tmax = _TILE_BYTES_MAX // (_COLS * itemsize)
    tmax = max(sub, tmax - (tmax % sub))

    # Lane-dense (rows, 512) slab with rows a multiple of the sublane minimum.
    rows = _round_up(-(-n // _COLS), sub)
    tile_m = _pick_tile_m(rows, sub, tmax)
    n_pad = rows * _COLS

    x_flat = x.reshape(-1)
    if n_pad != n:
        # Ragged size: one pad pass (and one slice pass below).  The common
        # aligned case skips both — reshape alone is metadata-only.
        x_flat = jnp.pad(x_flat, (0, n_pad - n))
    x2d = x_flat.reshape(rows, _COLS)

    params = jnp.stack([alpha, beta])       # (2,) f32, lives in SMEM

    grid = (pl.cdiv(rows, tile_m),)
    loc2d = pl.pallas_call(
        _affine_kernel,
        out_shape=jax.ShapeDtypeStruct((rows, _COLS), dt),
        grid=grid,
        in_specs=[
            pl.BlockSpec(memory_space=pltpu.SMEM),            # scalar params
            pl.BlockSpec((tile_m, _COLS), lambda i: (i, 0)),   # x tile
        ],
        out_specs=pl.BlockSpec((tile_m, _COLS), lambda i: (i, 0)),
        compiler_params=pltpu.CompilerParams(
            dimension_semantics=("parallel",),     # shard rows across TCs on v7x
            vmem_limit_bytes=48 * 1024 * 1024,     # 2x(in+out) 4 MiB tiles + headroom
        ),
        cost_estimate=pl.CostEstimate(
            flops=2 * n_pad,
            transcendentals=0,
            bytes_accessed=2 * n_pad * itemsize,
        ),
    )(params, x2d)

    if n_pad != n:
        loc = loc2d.reshape(-1)[:n].reshape(orig_shape)
    else:
        loc = loc2d.reshape(orig_shape)
    return loc, scale


if __name__ == "__main__":
    key = jax.random.PRNGKey(0)
    k_a, k_b, k_s, k1, k2, k3, k4 = jax.random.split(key, 7)

    # Deterministic scalar parameters (module has α, β, s ~ randn(())).
    alpha = jax.random.normal(k_a, ())
    beta = jax.random.normal(k_b, ())
    s = jax.random.normal(k_s, ())

    ref_scale = jnp.log1p(jnp.exp(s.astype(jnp.float32)))

    def ref_loc(x):
        return (alpha.astype(jnp.float32) * x.astype(jnp.float32)
                + beta.astype(jnp.float32)).astype(x.dtype)

    # 1) Tiny input (plain-JAX fallback path), shape consistent with the module.
    x_tiny = jax.random.normal(k1, (2, 4, 16, 16), dtype=jnp.float32)
    loc, scale = linear_normal_forward(alpha, beta, s, x_tiny)
    jax.block_until_ready((loc, scale))
    assert loc.shape == x_tiny.shape and loc.dtype == x_tiny.dtype
    assert jnp.allclose(loc, ref_loc(x_tiny), atol=1e-6, rtol=1e-6)
    assert jnp.allclose(scale, ref_scale, atol=1e-6, rtol=1e-6)

    # 2) Aligned f32 input -> Pallas kernel, 2 full tiles, no pad/slice.
    x_f32 = jax.random.normal(k2, (2048, 512), dtype=jnp.float32)
    loc, scale = linear_normal_forward(alpha, beta, s, x_f32)
    jax.block_until_ready((loc, scale))
    assert loc.shape == x_f32.shape and loc.dtype == x_f32.dtype
    assert jnp.allclose(loc, ref_loc(x_f32), atol=1e-6, rtol=1e-6)

    # 3) Aligned bf16 input -> Pallas kernel with native bf16 I/O.
    x_bf16 = jax.random.normal(k3, (1024, 512), dtype=jnp.bfloat16)
    loc, scale = linear_normal_forward(alpha, beta, s, x_bf16)
    jax.block_until_ready((loc, scale))
    assert loc.shape == x_bf16.shape and loc.dtype == x_bf16.dtype
    assert jnp.allclose(loc.astype(jnp.float32),
                        ref_loc(x_bf16).astype(jnp.float32),
                        atol=1e-2, rtol=1e-2)

    # 4) Ragged f32 input -> Pallas kernel via the pad/slice path.
    x_rag = jax.random.normal(k4, (321, 1000), dtype=jnp.float32)
    loc, scale = linear_normal_forward(alpha, beta, s, x_rag)
    jax.block_until_ready((loc, scale))
    assert loc.shape == x_rag.shape and loc.dtype == x_rag.dtype
    assert jnp.allclose(loc, ref_loc(x_rag), atol=1e-6, rtol=1e-6)

    print("KERNEL_OK")
</pallas_src>

<mosaic_0001>
module attributes {stable_mosaic.version = 11 : i64} {
  func.func @_affine_kernel(%arg0: i32, %arg1: memref<2xf32, #tpu.memory_space<smem>>, %arg2: memref<1024x512xf32, #tpu.memory_space<vmem>>, %arg3: memref<1024x512xf32, #tpu.memory_space<vmem>>) attributes {dimension_semantics = [#tpu.dimension_semantics<parallel>], iteration_bounds = array<i64: 2>, scalar_prefetch = 0 : i64, scratch_operands = 0 : i64, tpu.core_type = #tpu.core_type<tc>, window_params = [{transform_indices = @transform_0, window_bounds = array<i64: 2>}, {transform_indices = @transform_1, window_bounds = array<i64: 1024, 512>}, {transform_indices = @transform_2, window_bounds = array<i64: 1024, 512>}]} {
    %c0 = arith.constant 0 : index
    %0 = memref.load %arg1[%c0] : memref<2xf32, #tpu.memory_space<smem>>
    %c1 = arith.constant 1 : index
    %1 = memref.load %arg1[%c1] : memref<2xf32, #tpu.memory_space<smem>>
    %c0_0 = arith.constant 0 : index
    %c0_1 = arith.constant 0 : index
    %2 = vector.load %arg2[%c0_0, %c0_1] : memref<1024x512xf32, #tpu.memory_space<vmem>>, vector<1024x512xf32>
    %3 = vector.broadcast %0 : f32 to vector<1024x512xf32>
    %4 = arith.mulf %3, %2 : vector<1024x512xf32>
    %5 = vector.broadcast %1 : f32 to vector<1024x512xf32>
    %6 = arith.addf %4, %5 : vector<1024x512xf32>
    %c0_2 = arith.constant 0 : index
    %c0_3 = arith.constant 0 : index
    %7 = vector.load %arg3[%c0_2, %c0_3] : memref<1024x512xf32, #tpu.memory_space<vmem>>, vector<1024x512xf32>
    tpu.vector_store %arg3[%c0_2, %c0_3], %6 {strides = array<i32>} : memref<1024x512xf32, #tpu.memory_space<vmem>>, vector<1024x512xf32>,
    return
  }
  func.func @transform_0(%arg0: i32) -> i32 {
    %c0_i32 = arith.constant 0 : i32
    %c0_i32_0 = arith.constant 0 : i32
    return %c0_i32 : i32
  }
  func.func @transform_1(%arg0: i32) -> (i32, i32) {
    %c0_i32 = arith.constant 0 : i32
    %c0_i32_0 = arith.constant 0 : i32
    return %arg0, %c0_i32 : i32, i32
  }
  func.func @transform_2(%arg0: i32) -> (i32, i32) {
    %c0_i32 = arith.constant 0 : i32
    %c0_i32_0 = arith.constant 0 : i32
    return %arg0, %c0_i32 : i32, i32
  }
}

</mosaic_0001>

<llo_original>
// kernel: tpu_custom_call.1
$region0: #{tpu_custom_call.1}
  #allocation0 [shape = 'u32[]', space=smem, size = 0x4, offset = 0x4, fixed_abs, tag = 'smem constant byte address 0x4 - core index']
  #allocation1 [shape = 'u32[72,128]{1,0:T(1,128)}', space=vmem, size = 0x9000, scoped, tag = 'internal scratch']
  %s0 = inlined_call_operand.hbm [shape: f32[2], index: 0, kind: input, shape index: {}]
  %s1 = inlined_call_operand.hbm [shape: f32[2048,512], index: 1, kind: input, shape index: {}]
  %s2 = inlined_call_operand.hbm [shape: f32[2048,512], index: 2, kind: output, shape index: {}]
  %s3 = sld [smem:[#allocation0]]
  $region49: #{tpu_custom_call.1} parent=0
    _
  %s5 = ssub.s32 1, %s3
  %s6 = scalar_select 0, %s5, %s3
  $region1: #{tpu_custom_call.1} parent=0
    #allocation2 [shape = 'u8[512]{0}', space=smem, size = 0x200, scoped, tag = 'input window, operand 0, single buffered']
    #allocation3 [shape = 's32[2]{0}', space=sflag, size = 0x8, scoped, tag = 'scoped memory for tpu_custom_call.1']
    #allocation4 [shape = 's32[2]{0}', space=sflag, size = 0x8, scoped, tag = 'scoped memory for tpu_custom_call.1']
    #allocation5 [shape = 's32[2]{0}', space=sflag, size = 0x8, scoped, tag = 'scoped memory for tpu_custom_call.1']
    #allocation6 [shape = 'u8[4194304]{0}', space=vmem, size = 0x400000, scoped, tag = 'input window, operand 1']
    #allocation7 [shape = 'u8[4194304]{0}', space=vmem, size = 0x400000, scoped, tag = 'output window, operand 0']
    %7 = vsyncpa [#allocation5], 0
    %8 = vsyncpa [#allocation3], 0
    %s9 = scalar_lea.sflag [#allocation3], 1
    %10 = vsyncpa %s9, 0
    %11 = vsyncpa [#allocation4], 0
    %s12 = scalar_lea.sflag [#allocation4], 1
    %13 = vsyncpa %s12, 0
    loop: start=0, step=1, limit=4
    $region2: #{tpu_custom_call.1} parent=1 // loop_pre_header
      _
    $region3: #{tpu_custom_call.1} parent=1 // loop_header
      %s15 = sphi 0, %s19
      %p16 = scmp.ge.s32.totalorder %s15, 4
      %s23 = sphi 0, %s23
      %s25 = sphi 0, %s23
      %s26 = sphi 0, %s25
      %s40 = sphi 0, %s26
      %s46 = sphi 0, %s48
      %s49 = sphi 0, %s46
      %s50 = sphi 0, %s49
      %s66 = sphi 0, %s50
      %s72 = sphi 0, %s74
      %s75 = sphi 0, %s72
      %s76 = sphi 0, %s75
      %s92 = sphi 0, %s76
    $region4: #{tpu_custom_call.1} parent=1 // loop_header_branch
      %18 = sbr.rel (%p16) target = $region8
    $region5: #{tpu_custom_call.1} parent=1 // loop_body
      %s20 = ssub.s32 %s15, 1
      %s21 = ssub.s32 %s15, 2
      %s22 = sadd.s32 %s15, 1
      %s24 = sadd.s32 %s23, 1
      %p27 = scmp.eq.s32.totalorder %s15, 1
      %p28 = scmp.ne.s32.totalorder %s23, %s25
      %p29 = scmp.eq.s32.totalorder %s15, 0
      %p30 = por %p28, %p29
      %p31 = scmp.ne.s32.totalorder %s23, %s25
      %p32 = scmp.eq.s32.totalorder %s20, 1
      %p33 = por %p31, %p32
      %p34 = scmp.ne.s32.totalorder %s25, %s26
      %p35 = scmp.eq.s32.totalorder %s20, 0
      %p36 = por %p34, %p35
      %p37 = scmp.ne.s32.totalorder %s25, %s26
      %p38 = scmp.eq.s32.totalorder %s21, 1
      %p39 = por %p37, %p38
      %p41 = scmp.ne.s32.totalorder %s26, %s40
      %p42 = scmp.eq.s32.totalorder %s21, 0
      %p43 = por %p41, %p42
      %s44 = ssub.s32 %s15, %s22
      %p45 = scmp.eq.s32.totalorder %s44, 0
      %s47 = sadd.s32 %s46, 1
      %s48 = scalar_select %p45, %s46, %s47
      %p51 = pneg %p45
      %p52 = scmp.eq.s32.totalorder %s15, 1
      %p53 = por %p51, %p52
      %p54 = scmp.ne.s32.totalorder %s46, %s49
      %p55 = scmp.eq.s32.totalorder %s15, 0
      %p56 = por %p54, %p55
      %p57 = scmp.ne.s32.totalorder %s46, %s49
      %p58 = scmp.eq.s32.totalorder %s20, 1
      %p59 = por %p57, %p58
      %p60 = scmp.ne.s32.totalorder %s49, %s50
      %p61 = scmp.eq.s32.totalorder %s20, 0
      %p62 = por %p60, %p61
      %p63 = scmp.ne.s32.totalorder %s49, %s50
      %p64 = scmp.eq.s32.totalorder %s21, 1
      %p65 = por %p63, %p64
      %p67 = scmp.ne.s32.totalorder %s50, %s66
      %p68 = scmp.eq.s32.totalorder %s21, 0
      %p69 = por %p67, %p68
      %s70 = ssub.s32 %s15, %s22
      %p71 = scmp.eq.s32.totalorder %s70, 0
      %s73 = sadd.s32 %s72, 1
      %s74 = scalar_select %p71, %s72, %s73
      %p77 = pneg %p71
      %p78 = scmp.eq.s32.totalorder %s15, 1
      %p79 = por %p77, %p78
      %p80 = scmp.ne.s32.totalorder %s72, %s75
      %p81 = scmp.eq.s32.totalorder %s15, 0
      %p82 = por %p80, %p81
      %p83 = scmp.ne.s32.totalorder %s72, %s75
      %p84 = scmp.eq.s32.totalorder %s20, 1
      %p85 = por %p83, %p84
      %p86 = scmp.ne.s32.totalorder %s75, %s76
      %p87 = scmp.eq.s32.totalorder %s20, 0
      %p88 = por %p86, %p87
      %p89 = scmp.ne.s32.totalorder %s75, %s76
      %p90 = scmp.eq.s32.totalorder %s21, 1
      %p91 = por %p89, %p90
      %p93 = scmp.ne.s32.totalorder %s76, %s92
      %p94 = scmp.eq.s32.totalorder %s21, 0
      %p95 = por %p93, %p94
      %p96 = scmp.le.s32.totalorder 1, %s15
      %p97 = scmp.lt.s32.totalorder %s15, 3
      %p98 = pnand %p96, %p97
      %p99 = pneg %p98
      // Predicated region
      $region9: #{tpu_custom_call.1} parent=5 // pred_check
        _
      $region10: #{tpu_custom_call.1} parent=5 // pred_check_branch
        %101 = sbr.rel (%p98) target = $region12
      $region11: #{tpu_custom_call.1} parent=5 // pred_region
        %s102 = ssub.s32 %s15, 1
        // Predicated region
        $region13: #{tpu_custom_call.1} parent=11 // pred_check
          %p103 = pneg %p36
        $region14: #{tpu_custom_call.1} parent=11 // pred_check_branch
          %105 = sbr.rel (%p103) target = $region16
        $region15: #{tpu_custom_call.1} parent=11 // pred_region
          %107 = vsyncadd [#allocation5], 0
          %s109 = sshll.u32 %s0, 4
          %s110 = int_to_ptr.hbm [resolvable:$true] %s109
          %112 = dma.hbm_to_smem %s110, 16, [#allocation2], [#allocation5]
        $region16: #{tpu_custom_call.1} parent=11 // pred_fallthru
          _
      $region12: #{tpu_custom_call.1} parent=5 // pred_fallthru
        _
      %p113 = scmp.lt.s32.totalorder %s15, 2
      // Predicated region
      $region17: #{tpu_custom_call.1} parent=5 // pred_check
        %p114 = pneg %p113
      $region18: #{tpu_custom_call.1} parent=5 // pred_check_branch
        %116 = sbr.rel (%p114) target = $region20
      $region19: #{tpu_custom_call.1} parent=5 // pred_region
        // Predicated region
        $region21: #{tpu_custom_call.1} parent=19 // pred_check
          %p117 = pneg %p56
        $region22: #{tpu_custom_call.1} parent=19 // pred_check_branch
          %119 = sbr.rel (%p117) target = $region24
        $region23: #{tpu_custom_call.1} parent=19 // pred_region
          %s120 = sand.u32 %s46, 1
          %s121 = scalar_lea.sflag [#allocation3], %s120
          %s122 = sand.u32 %s46, 1
          %s123 = smul.addr %s122, 4096
          %s124 = scalar_lea.vmem [#allocation6], %s123
          %s125 = smul.u32 128, %s15
          %127 = vsyncadd %s121, 0
          %s128 = smul.addr %s125, 4
          %s129 = smul.addr %s128, 8
          %s130 = scalar_lea.hbm %s1, %s129
          %s131 = sshll.u32 %s130, 4
          %s132 = int_to_ptr.hbm [resolvable:$true] %s131
          %s133 = sshll.u32 %s124, 4
          %s134 = int_to_ptr.vmem [resolvable:$true] %s133
          %139 = dma.hbm_to_vmem [thread:$0]  %s132, 65536, %s134, %s121, 512, 512, 32
        $region24: #{tpu_custom_call.1} parent=19 // pred_fallthru
          _
      $region20: #{tpu_custom_call.1} parent=5 // pred_fallthru
        _
      %p140 = scmp.le.s32.totalorder 1, %s15
      %p141 = scmp.lt.s32.totalorder %s15, 3
      %p142 = pnand %p140, %p141
      %p143 = pneg %p142
      // Predicated region
      $region25: #{tpu_custom_call.1} parent=5 // pred_check
        _
      $region26: #{tpu_custom_call.1} parent=5 // pred_check_branch
        %145 = sbr.rel (%p142) target = $region28
      $region27: #{tpu_custom_call.1} parent=5 // pred_region
        %s146 = ssub.s32 %s15, 1
        // Predicated region
        $region29: #{tpu_custom_call.1} parent=27 // pred_check
          %p147 = pneg %p36
        $region30: #{tpu_custom_call.1} parent=27 // pred_check_branch
          %149 = sbr.rel (%p147) target = $region32
        $region31: #{tpu_custom_call.1} parent=27 // pred_region
          %151 = dma.done [#allocation5], 16
        $region32: #{tpu_custom_call.1} parent=27 // pred_fallthru
          _
        %s152 = sand.u32 %s49, 1
        %s153 = scalar_lea.sflag [#allocation3], %s152
        %s154 = sand.u32 %s49, 1
        %s155 = smul.addr %s154, 4096
        %s156 = scalar_lea.vmem [#allocation6], %s155
        // Predicated region
        $region33: #{tpu_custom_call.1} parent=27 // pred_check
          %p157 = pneg %p62
        $region34: #{tpu_custom_call.1} parent=27 // pred_check_branch
          %159 = sbr.rel (%p157) target = $region36
        $region35: #{tpu_custom_call.1} parent=27 // pred_region
          %161 = dma.done %s153, 65536
        $region36: #{tpu_custom_call.1} parent=27 // pred_fallthru
          _
        %162 = sfence
        %p163 = pneg %p36
        %p164 = pneg %p33
        %s165 = sand.u32 %s49, 1
        %s166 = scalar_lea.sflag [#allocation3], %s165
        %s167 = sand.u32 %s49, 1
        %s168 = smul.addr %s167, 4096
        %s169 = scalar_lea.vmem [#allocation6], %s168
        %p170 = pneg %p62
        %p171 = pneg %p59
        %p172 = pneg %p88
        %p173 = pneg %p85
        %s174 = sand.u32 %s75, 1
        %s175 = scalar_lea.sflag [#allocation4], %s174
        %s176 = sand.u32 %s75, 1
        %s177 = smul.addr %s176, 4096
        %s178 = scalar_lea.vmem [#allocation7], %s177
        %s179 = smul.u32 128, %s20
        %s180 = smul.u32 128, %s20
        %s181 = sld [smem:[#allocation2]]
        %s182 = sld [smem:[#allocation2 + $0x1]]
        %v183 = vld [vmem:[%s156] sm:$0xff]
        %v184 = vld [vmem:[%s156 + $0x8] sm:$0xff]
        %v185 = vld [vmem:[%s156 + $0x10] sm:$0xff]
        %v186 = vld [vmem:[%s156 + $0x18] sm:$0xff]
        %v187 = vld [vmem:[%s156 + $0x20] sm:$0xff]
        %v188 = vld [vmem:[%s156 + $0x28] sm:$0xff]
        %v189 = vld [vmem:[%s156 + $0x30] sm:$0xff]
        %v190 = vld [vmem:[%s156 + $0x38] sm:$0xff]
        %v191 = vld [vmem:[%s156 + $0x40] sm:$0xff]
        %v192 = vld [vmem:[%s156 + $0x48] sm:$0xff]
        %v193 = vld [vmem:[%s156 + $0x50] sm:$0xff]
        %v194 = vld [vmem:[%s156 + $0x58] sm:$0xff]
        %v195 = vld [vmem:[%s156 + $0x60] sm:$0xff]
        %v196 = vld [vmem:[%s156 + $0x68] sm:$0xff]
        %v197 = vld [vmem:[%s156 + $0x70] sm:$0xff]
        %v198 = vld [vmem:[%s156 + $0x78] sm:$0xff]
        %v199 = vld [vmem:[%s156 + $0x80] sm:$0xff]
        %v200 = vld [vmem:[%s156 + $0x88] sm:$0xff]
        %v201 = vld [vmem:[%s156 + $0x90] sm:$0xff]
        %v202 = vld [vmem:[%s156 + $0x98] sm:$0xff]
        %v203 = vld [vmem:[%s156 + $0xa0] sm:$0xff]
        %v204 = vld [vmem:[%s156 + $0xa8] sm:$0xff]
        %v205 = vld [vmem:[%s156 + $0xb0] sm:$0xff]
        %v206 = vld [vmem:[%s156 + $0xb8] sm:$0xff]
        %v207 = vld [vmem:[%s156 + $0xc0] sm:$0xff]
        %v208 = vld [vmem:[%s156 + $0xc8] sm:$0xff]
        %v209 = vld [vmem:[%s156 + $0xd0] sm:$0xff]
        %v210 = vld [vmem:[%s156 + $0xd8] sm:$0xff]
        %v211 = vld [vmem:[%s156 + $0xe0] sm:$0xff]
        %v212 = vld [vmem:[%s156 + $0xe8] sm:$0xff]
        %v213 = vld [vmem:[%s156 + $0xf0] sm:$0xff]
        %v214 = vld [vmem:[%s156 + $0xf8] sm:$0xff]
        %v215 = vld [vmem:[%s156 + $0x100] sm:$0xff]
        %v216 = vld [vmem:[%s156 + $0x108] sm:$0xff]
        %v217 = vld [vmem:[%s156 + $0x110] sm:$0xff]
        %v218 = vld [vmem:[%s156 + $0x118] sm:$0xff]
        %v219 = vld [vmem:[%s156 + $0x120] sm:$0xff]
        %v220 = vld [vmem:[%s156 + $0x128] sm:$0xff]
        %v221 = vld [vmem:[%s156 + $0x130] sm:$0xff]
        %v222 = vld [vmem:[%s156 + $0x138] sm:$0xff]
        %v223 = vld [vmem:[%s156 + $0x140] sm:$0xff]
        %v224 = vld [vmem:[%s156 + $0x148] sm:$0xff]
        %v225 = vld [vmem:[%s156 + $0x150] sm:$0xff]
        %v226 = vld [vmem:[%s156 + $0x158] sm:$0xff]
        %v227 = vld [vmem:[%s156 + $0x160] sm:$0xff]
        %v228 = vld [vmem:[%s156 + $0x168] sm:$0xff]
        %v229 = vld [vmem:[%s156 + $0x170] sm:$0xff]
        %v230 = vld [vmem:[%s156 + $0x178] sm:$0xff]
        %v231 = vld [vmem:[%s156 + $0x180] sm:$0xff]
        %v232 = vld [vmem:[%s156 + $0x188] sm:$0xff]
        %v233 = vld [vmem:[%s156 + $0x190] sm:$0xff]
        %v234 = vld [vmem:[%s156 + $0x198] sm:$0xff]
        %v235 = vld [vmem:[%s156 + $0x1a0] sm:$0xff]
        %v236 = vld [vmem:[%s156 + $0x1a8] sm:$0xff]
        %v237 = vld [vmem:[%s156 + $0x1b0] sm:$0xff]
        %v238 = vld [vmem:[%s156 + $0x1b8] sm:$0xff]
        %v239 = vld [vmem:[%s156 + $0x1c0] sm:$0xff]
        %v240 = vld [vmem:[%s156 + $0x1c8] sm:$0xff]
        %v241 = vld [vmem:[%s156 + $0x1d0] sm:$0xff]
        %v242 = vld [vmem:[%s156 + $0x1d8] sm:$0xff]
        %v243 = vld [vmem:[%s156 + $0x1e0] sm:$0xff]
        %v244 = vld [vmem:[%s156 + $0x1e8] sm:$0xff]
        %v245 = vld [vmem:[%s156 + $0x1f0] sm:$0xff]
        %v246 = vld [vmem:[%s156 + $0x1f8] sm:$0xff]
        %v247 = vld [vmem:[%s156 + $0x200] sm:$0xff]
        %v248 = vld [vmem:[%s156 + $0x208] sm:$0xff]
        %v249 = vld [vmem:[%s156 + $0x210] sm:$0xff]
        %v250 = vld [vmem:[%s156 + $0x218] sm:$0xff]
        %v251 = vld [vmem:[%s156 + $0x220] sm:$0xff]
        %v252 = vld [vmem:[%s156 + $0x228] sm:$0xff]
        %v253 = vld [vmem:[%s156 + $0x230] sm:$0xff]
        %v254 = vld [vmem:[%s156 + $0x238] sm:$0xff]
        %v255 = vld [vmem:[%s156 + $0x240] sm:$0xff]
        %v256 = vld [vmem:[%s156 + $0x248] sm:$0xff]
        %v257 = vld [vmem:[%s156 + $0x250] sm:$0xff]
        %v258 = vld [vmem:[%s156 + $0x258] sm:$0xff]
        %v259 = vld [vmem:[%s156 + $0x260] sm:$0xff]
        %v260 = vld [vmem:[%s156 + $0x268] sm:$0xff]
        %v261 = vld [vmem:[%s156 + $0x270] sm:$0xff]
        %v262 = vld [vmem:[%s156 + $0x278] sm:$0xff]
        %v263 = vld [vmem:[%s156 + $0x280] sm:$0xff]
        %v264 = vld [vmem:[%s156 + $0x288] sm:$0xff]
        %v265 = vld [vmem:[%s156 + $0x290] sm:$0xff]
        %v266 = vld [vmem:[%s156 + $0x298] sm:$0xff]
        %v267 = vld [vmem:[%s156 + $0x2a0] sm:$0xff]
        %v268 = vld [vmem:[%s156 + $0x2a8] sm:$0xff]
        %v269 = vld [vmem:[%s156 + $0x2b0] sm:$0xff]
        %v270 = vld [vmem:[%s156 + $0x2b8] sm:$0xff]
        %v271 = vld [vmem:[%s156 + $0x2c0] sm:$0xff]
        %v272 = vld [vmem:[%s156 + $0x2c8] sm:$0xff]
        %v273 = vld [vmem:[%s156 + $0x2d0] sm:$0xff]
        %v274 = vld [vmem:[%s156 + $0x2d8] sm:$0xff]
        %v275 = vld [vmem:[%s156 + $0x2e0] sm:$0xff]
        %v276 = vld [vmem:[%s156 + $0x2e8] sm:$0xff]
        %v277 = vld [vmem:[%s156 + $0x2f0] sm:$0xff]
        %v278 = vld [vmem:[%s156 + $0x2f8] sm:$0xff]
        %v279 = vld [vmem:[%s156 + $0x300] sm:$0xff]
        %v280 = vld [vmem:[%s156 + $0x308] sm:$0xff]
        %v281 = vld [vmem:[%s156 + $0x310] sm:$0xff]
        %v282 = vld [vmem:[%s156 + $0x318] sm:$0xff]
        %v283 = vld [vmem:[%s156 + $0x320] sm:$0xff]
        %v284 = vld [vmem:[%s156 + $0x328] sm:$0xff]
        %v285 = vld [vmem:[%s156 + $0x330] sm:$0xff]
        %v286 = vld [vmem:[%s156 + $0x338] sm:$0xff]
        %v287 = vld [vmem:[%s156 + $0x340] sm:$0xff]
        %v288 = vld [vmem:[%s156 + $0x348] sm:$0xff]
        %v289 = vld [vmem:[%s156 + $0x350] sm:$0xff]
        %v290 = vld [vmem:[%s156 + $0x358] sm:$0xff]
        %v291 = vld [vmem:[%s156 + $0x360] sm:$0xff]
        %v292 = vld [vmem:[%s156 + $0x368] sm:$0xff]
        %v293 = vld [vmem:[%s156 + $0x370] sm:$0xff]
        %v294 = vld [vmem:[%s156 + $0x378] sm:$0xff]
        %v295 = vld [vmem:[%s156 + $0x380] sm:$0xff]
        %v296 = vld [vmem:[%s156 + $0x388] sm:$0xff]
        %v297 = vld [vmem:[%s156 + $0x390] sm:$0xff]
        %v298 = vld [vmem:[%s156 + $0x398] sm:$0xff]
        %v299 = vld [vmem:[%s156 + $0x3a0] sm:$0xff]
        %v300 = vld [vmem:[%s156 + $0x3a8] sm:$0xff]
        %v301 = vld [vmem:[%s156 + $0x3b0] sm:$0xff]
        %v302 = vld [vmem:[%s156 + $0x3b8] sm:$0xff]
        %v303 = vld [vmem:[%s156 + $0x3c0] sm:$0xff]
        %v304 = vld [vmem:[%s156 + $0x3c8] sm:$0xff]
        %v305 = vld [vmem:[%s156 + $0x3d0] sm:$0xff]
        %v306 = vld [vmem:[%s156 + $0x3d8] sm:$0xff]
        %v307 = vld [vmem:[%s156 + $0x3e0] sm:$0xff]
        %v308 = vld [vmem:[%s156 + $0x3e8] sm:$0xff]
        %v309 = vld [vmem:[%s156 + $0x3f0] sm:$0xff]
        %v310 = vld [vmem:[%s156 + $0x3f8] sm:$0xff]
        %v311 = vld [vmem:[%s156 + $0x400] sm:$0xff]
        %v312 = vld [vmem:[%s156 + $0x408] sm:$0xff]
        %v313 = vld [vmem:[%s156 + $0x410] sm:$0xff]
        %v314 = vld [vmem:[%s156 + $0x418] sm:$0xff]
        %v315 = vld [vmem:[%s156 + $0x420] sm:$0xff]
        %v316 = vld [vmem:[%s156 + $0x428] sm:$0xff]
        %v317 = vld [vmem:[%s156 + $0x430] sm:$0xff]
        %v318 = vld [vmem:[%s156 + $0x438] sm:$0xff]
        %v319 = vld [vmem:[%s156 + $0x440] sm:$0xff]
        %v320 = vld [vmem:[%s156 + $0x448] sm:$0xff]
        %v321 = vld [vmem:[%s156 + $0x450] sm:$0xff]
        %v322 = vld [vmem:[%s156 + $0x458] sm:$0xff]
        %v323 = vld [vmem:[%s156 + $0x460] sm:$0xff]
        %v324 = vld [vmem:[%s156 + $0x468] sm:$0xff]
        %v325 = vld [vmem:[%s156 + $0x470] sm:$0xff]
        %v326 = vld [vmem:[%s156 + $0x478] sm:$0xff]
        %v327 = vld [vmem:[%s156 + $0x480] sm:$0xff]
        %v328 = vld [vmem:[%s156 + $0x488] sm:$0xff]
        %v329 = vld [vmem:[%s156 + $0x490] sm:$0xff]
        %v330 = vld [vmem:[%s156 + $0x498] sm:$0xff]
        %v331 = vld [vmem:[%s156 + $0x4a0] sm:$0xff]
        %v332 = vld [vmem:[%s156 + $0x4a8] sm:$0xff]
        %v333 = vld [vmem:[%s156 + $0x4b0] sm:$0xff]
        %v334 = vld [vmem:[%s156 + $0x4b8] sm:$0xff]
        %v335 = vld [vmem:[%s156 + $0x4c0] sm:$0xff]
        %v336 = vld [vmem:[%s156 + $0x4c8] sm:$0xff]
        %v337 = vld [vmem:[%s156 + $0x4d0] sm:$0xff]
        %v338 = vld [vmem:[%s156 + $0x4d8] sm:$0xff]
        %v339 = vld [vmem:[%s156 + $0x4e0] sm:$0xff]
        %v340 = vld [vmem:[%s156 + $0x4e8] sm:$0xff]
        %v341 = vld [vmem:[%s156 + $0x4f0] sm:$0xff]
        %v342 = vld [vmem:[%s156 + $0x4f8] sm:$0xff]
        %v343 = vld [vmem:[%s156 + $0x500] sm:$0xff]
        %v344 = vld [vmem:[%s156 + $0x508] sm:$0xff]
        %v345 = vld [vmem:[%s156 + $0x510] sm:$0xff]
        %v346 = vld [vmem:[%s156 + $0x518] sm:$0xff]
        %v347 = vld [vmem:[%s156 + $0x520] sm:$0xff]
        %v348 = vld [vmem:[%s156 + $0x528] sm:$0xff]
        %v349 = vld [vmem:[%s156 + $0x530] sm:$0xff]
        %v350 = vld [vmem:[%s156 + $0x538] sm:$0xff]
        %v351 = vld [vmem:[%s156 + $0x540] sm:$0xff]
        %v352 = vld [vmem:[%s156 + $0x548] sm:$0xff]
        %v353 = vld [vmem:[%s156 + $0x550] sm:$0xff]
        %v354 = vld [vmem:[%s156 + $0x558] sm:$0xff]
        %v355 = vld [vmem:[%s156 + $0x560] sm:$0xff]
        %v356 = vld [vmem:[%s156 + $0x568] sm:$0xff]
        %v357 = vld [vmem:[%s156 + $0x570] sm:$0xff]
        %v358 = vld [vmem:[%s156 + $0x578] sm:$0xff]
        %v359 = vld [vmem:[%s156 + $0x580] sm:$0xff]
        %v360 = vld [vmem:[%s156 + $0x588] sm:$0xff]
        %v361 = vld [vmem:[%s156 + $0x590] sm:$0xff]
        %v362 = vld [vmem:[%s156 + $0x598] sm:$0xff]
        %v363 = vld [vmem:[%s156 + $0x5a0] sm:$0xff]
        %v364 = vld [vmem:[%s156 + $0x5a8] sm:$0xff]
        %v365 = vld [vmem:[%s156 + $0x5b0] sm:$0xff]
        %v366 = vld [vmem:[%s156 + $0x5b8] sm:$0xff]
        %v367 = vld [vmem:[%s156 + $0x5c0] sm:$0xff]
        %v368 = vld [vmem:[%s156 + $0x5c8] sm:$0xff]
        %v369 = vld [vmem:[%s156 + $0x5d0] sm:$0xff]
        %v370 = vld [vmem:[%s156 + $0x5d8] sm:$0xff]
        %v371 = vld [vmem:[%s156 + $0x5e0] sm:$0xff]
        %v372 = vld [vmem:[%s156 + $0x5e8] sm:$0xff]
        %v373 = vld [vmem:[%s156 + $0x5f0] sm:$0xff]
        %v374 = vld [vmem:[%s156 + $0x5f8] sm:$0xff]
        %v375 = vld [vmem:[%s156 + $0x600] sm:$0xff]
        %v376 = vld [vmem:[%s156 + $0x608] sm:$0xff]
        %v377 = vld [vmem:[%s156 + $0x610] sm:$0xff]
        %v378 = vld [vmem:[%s156 + $0x618] sm:$0xff]
        %v379 = vld [vmem:[%s156 + $0x620] sm:$0xff]
        %v380 = vld [vmem:[%s156 + $0x628] sm:$0xff]
        %v381 = vld [vmem:[%s156 + $0x630] sm:$0xff]
        %v382 = vld [vmem:[%s156 + $0x638] sm:$0xff]
        %v383 = vld [vmem:[%s156 + $0x640] sm:$0xff]
        %v384 = vld [vmem:[%s156 + $0x648] sm:$0xff]
        %v385 = vld [vmem:[%s156 + $0x650] sm:$0xff]
        %v386 = vld [vmem:[%s156 + $0x658] sm:$0xff]
        %v387 = vld [vmem:[%s156 + $0x660] sm:$0xff]
        %v388 = vld [vmem:[%s156 + $0x668] sm:$0xff]
        %v389 = vld [vmem:[%s156 + $0x670] sm:$0xff]
        %v390 = vld [vmem:[%s156 + $0x678] sm:$0xff]
        %v391 = vld [vmem:[%s156 + $0x680] sm:$0xff]
        %v392 = vld [vmem:[%s156 + $0x688] sm:$0xff]
        %v393 = vld [vmem:[%s156 + $0x690] sm:$0xff]
        %v394 = vld [vmem:[%s156 + $0x698] sm:$0xff]
        %v395 = vld [vmem:[%s156 + $0x6a0] sm:$0xff]
        %v396 = vld [vmem:[%s156 + $0x6a8] sm:$0xff]
        %v397 = vld [vmem:[%s156 + $0x6b0] sm:$0xff]
        %v398 = vld [vmem:[%s156 + $0x6b8] sm:$0xff]
        %v399 = vld [vmem:[%s156 + $0x6c0] sm:$0xff]
        %v400 = vld [vmem:[%s156 + $0x6c8] sm:$0xff]
        %v401 = vld [vmem:[%s156 + $0x6d0] sm:$0xff]
        %v402 = vld [vmem:[%s156 + $0x6d8] sm:$0xff]
        %v403 = vld [vmem:[%s156 + $0x6e0] sm:$0xff]
        %v404 = vld [vmem:[%s156 + $0x6e8] sm:$0xff]
        %v405 = vld [vmem:[%s156 + $0x6f0] sm:$0xff]
        %v406 = vld [vmem:[%s156 + $0x6f8] sm:$0xff]
        %v407 = vld [vmem:[%s156 + $0x700] sm:$0xff]
        %v408 = vld [vmem:[%s156 + $0x708] sm:$0xff]
        %v409 = vld [vmem:[%s156 + $0x710] sm:$0xff]
        %v410 = vld [vmem:[%s156 + $0x718] sm:$0xff]
        %v411 = vld [vmem:[%s156 + $0x720] sm:$0xff]
        %v412 = vld [vmem:[%s156 + $0x728] sm:$0xff]
        %v413 = vld [vmem:[%s156 + $0x730] sm:$0xff]
        %v414 = vld [vmem:[%s156 + $0x738] sm:$0xff]
        %v415 = vld [vmem:[%s156 + $0x740] sm:$0xff]
        %v416 = vld [vmem:[%s156 + $0x748] sm:$0xff]
        %v417 = vld [vmem:[%s156 + $0x750] sm:$0xff]
        %v418 = vld [vmem:[%s156 + $0x758] sm:$0xff]
        %v419 = vld [vmem:[%s156 + $0x760] sm:$0xff]
        %v420 = vld [vmem:[%s156 + $0x768] sm:$0xff]
        %v421 = vld [vmem:[%s156 + $0x770] sm:$0xff]
        %v422 = vld [vmem:[%s156 + $0x778] sm:$0xff]
        %v423 = vld [vmem:[%s156 + $0x780] sm:$0xff]
        %v424 = vld [vmem:[%s156 + $0x788] sm:$0xff]
        %v425 = vld [vmem:[%s156 + $0x790] sm:$0xff]
        %v426 = vld [vmem:[%s156 + $0x798] sm:$0xff]
        %v427 = vld [vmem:[%s156 + $0x7a0] sm:$0xff]
        %v428 = vld [vmem:[%s156 + $0x7a8] sm:$0xff]
        %v429 = vld [vmem:[%s156 + $0x7b0] sm:$0xff]
        %v430 = vld [vmem:[%s156 + $0x7b8] sm:$0xff]
        %v431 = vld [vmem:[%s156 + $0x7c0] sm:$0xff]
        %v432 = vld [vmem:[%s156 + $0x7c8] sm:$0xff]
        %v433 = vld [vmem:[%s156 + $0x7d0] sm:$0xff]
        %v434 = vld [vmem:[%s156 + $0x7d8] sm:$0xff]
        %v435 = vld [vmem:[%s156 + $0x7e0] sm:$0xff]
        %v436 = vld [vmem:[%s156 + $0x7e8] sm:$0xff]
        %v437 = vld [vmem:[%s156 + $0x7f0] sm:$0xff]
        %v438 = vld [vmem:[%s156 + $0x7f8] sm:$0xff]
        %v439 = vld [vmem:[%s156 + $0x800] sm:$0xff]
        %v440 = vld [vmem:[%s156 + $0x808] sm:$0xff]
        %v441 = vld [vmem:[%s156 + $0x810] sm:$0xff]
        %v442 = vld [vmem:[%s156 + $0x818] sm:$0xff]
        %v443 = vld [vmem:[%s156 + $0x820] sm:$0xff]
        %v444 = vld [vmem:[%s156 + $0x828] sm:$0xff]
        %v445 = vld [vmem:[%s156 + $0x830] sm:$0xff]
        %v446 = vld [vmem:[%s156 + $0x838] sm:$0xff]
        %v447 = vld [vmem:[%s156 + $0x840] sm:$0xff]
        %v448 = vld [vmem:[%s156 + $0x848] sm:$0xff]
        %v449 = vld [vmem:[%s156 + $0x850] sm:$0xff]
        %v450 = vld [vmem:[%s156 + $0x858] sm:$0xff]
        %v451 = vld [vmem:[%s156 + $0x860] sm:$0xff]
        %v452 = vld [vmem:[%s156 + $0x868] sm:$0xff]
        %v453 = vld [vmem:[%s156 + $0x870] sm:$0xff]
        %v454 = vld [vmem:[%s156 + $0x878] sm:$0xff]
        %v455 = vld [vmem:[%s156 + $0x880] sm:$0xff]
        %v456 = vld [vmem:[%s156 + $0x888] sm:$0xff]
        %v457 = vld [vmem:[%s156 + $0x890] sm:$0xff]
        %v458 = vld [vmem:[%s156 + $0x898] sm:$0xff]
        %v459 = vld [vmem:[%s156 + $0x8a0] sm:$0xff]
        %v460 = vld [vmem:[%s156 + $0x8a8] sm:$0xff]
        %v461 = vld [vmem:[%s156 + $0x8b0] sm:$0xff]
        %v462 = vld [vmem:[%s156 + $0x8b8] sm:$0xff]
        %v463 = vld [vmem:[%s156 + $0x8c0] sm:$0xff]
        %v464 = vld [vmem:[%s156 + $0x8c8] sm:$0xff]
        %v465 = vld [vmem:[%s156 + $0x8d0] sm:$0xff]
        %v466 = vld [vmem:[%s156 + $0x8d8] sm:$0xff]
        %v467 = vld [vmem:[%s156 + $0x8e0] sm:$0xff]
        %v468 = vld [vmem:[%s156 + $0x8e8] sm:$0xff]
        %v469 = vld [vmem:[%s156 + $0x8f0] sm:$0xff]
        %v470 = vld [vmem:[%s156 + $0x8f8] sm:$0xff]
        %v471 = vld [vmem:[%s156 + $0x900] sm:$0xff]
        %v472 = vld [vmem:[%s156 + $0x908] sm:$0xff]
        %v473 = vld [vmem:[%s156 + $0x910] sm:$0xff]
        %v474 = vld [vmem:[%s156 + $0x918] sm:$0xff]
        %v475 = vld [vmem:[%s156 + $0x920] sm:$0xff]
        %v476 = vld [vmem:[%s156 + $0x928] sm:$0xff]
        %v477 = vld [vmem:[%s156 + $0x930] sm:$0xff]
        %v478 = vld [vmem:[%s156 + $0x938] sm:$0xff]
        %v479 = vld [vmem:[%s156 + $0x940] sm:$0xff]
        %v480 = vld [vmem:[%s156 + $0x948] sm:$0xff]
        %v481 = vld [vmem:[%s156 + $0x950] sm:$0xff]
        %v482 = vld [vmem:[%s156 + $0x958] sm:$0xff]
        %v483 = vld [vmem:[%s156 + $0x960] sm:$0xff]
        %v484 = vld [vmem:[%s156 + $0x968] sm:$0xff]
        %v485 = vld [vmem:[%s156 + $0x970] sm:$0xff]
        %v486 = vld [vmem:[%s156 + $0x978] sm:$0xff]
        %v487 = vld [vmem:[%s156 + $0x980] sm:$0xff]
        %v488 = vld [vmem:[%s156 + $0x988] sm:$0xff]
        %v489 = vld [vmem:[%s156 + $0x990] sm:$0xff]
        %v490 = vld [vmem:[%s156 + $0x998] sm:$0xff]
        %v491 = vld [vmem:[%s156 + $0x9a0] sm:$0xff]
        %v492 = vld [vmem:[%s156 + $0x9a8] sm:$0xff]
        %v493 = vld [vmem:[%s156 + $0x9b0] sm:$0xff]
        %v494 = vld [vmem:[%s156 + $0x9b8] sm:$0xff]
        %v495 = vld [vmem:[%s156 + $0x9c0] sm:$0xff]
        %v496 = vld [vmem:[%s156 + $0x9c8] sm:$0xff]
        %v497 = vld [vmem:[%s156 + $0x9d0] sm:$0xff]
        %v498 = vld [vmem:[%s156 + $0x9d8] sm:$0xff]
        %v499 = vld [vmem:[%s156 + $0x9e0] sm:$0xff]
        %v500 = vld [vmem:[%s156 + $0x9e8] sm:$0xff]
        %v501 = vld [vmem:[%s156 + $0x9f0] sm:$0xff]
        %v502 = vld [vmem:[%s156 + $0x9f8] sm:$0xff]
        %v503 = vld [vmem:[%s156 + $0xa00] sm:$0xff]
        %v504 = vld [vmem:[%s156 + $0xa08] sm:$0xff]
        %v505 = vld [vmem:[%s156 + $0xa10] sm:$0xff]
        %v506 = vld [vmem:[%s156 + $0xa18] sm:$0xff]
        %v507 = vld [vmem:[%s156 + $0xa20] sm:$0xff]
        %v508 = vld [vmem:[%s156 + $0xa28] sm:$0xff]
        %v509 = vld [vmem:[%s156 + $0xa30] sm:$0xff]
        %v510 = vld [vmem:[%s156 + $0xa38] sm:$0xff]
        %v511 = vld [vmem:[%s156 + $0xa40] sm:$0xff]
        %v512 = vld [vmem:[%s156 + $0xa48] sm:$0xff]
        %v513 = vld [vmem:[%s156 + $0xa50] sm:$0xff]
        %v514 = vld [vmem:[%s156 + $0xa58] sm:$0xff]
        %v515 = vld [vmem:[%s156 + $0xa60] sm:$0xff]
        %v516 = vld [vmem:[%s156 + $0xa68] sm:$0xff]
        %v517 = vld [vmem:[%s156 + $0xa70] sm:$0xff]
        %v518 = vld [vmem:[%s156 + $0xa78] sm:$0xff]
        %v519 = vld [vmem:[%s156 + $0xa80] sm:$0xff]
        %v520 = vld [vmem:[%s156 + $0xa88] sm:$0xff]
        %v521 = vld [vmem:[%s156 + $0xa90] sm:$0xff]
        %v522 = vld [vmem:[%s156 + $0xa98] sm:$0xff]
        %v523 = vld [vmem:[%s156 + $0xaa0] sm:$0xff]
        %v524 = vld [vmem:[%s156 + $0xaa8] sm:$0xff]
        %v525 = vld [vmem:[%s156 + $0xab0] sm:$0xff]
        %v526 = vld [vmem:[%s156 + $0xab8] sm:$0xff]
        %v527 = vld [vmem:[%s156 + $0xac0] sm:$0xff]
        %v528 = vld [vmem:[%s156 + $0xac8] sm:$0xff]
        %v529 = vld [vmem:[%s156 + $0xad0] sm:$0xff]
        %v530 = vld [vmem:[%s156 + $0xad8] sm:$0xff]
        %v531 = vld [vmem:[%s156 + $0xae0] sm:$0xff]
        %v532 = vld [vmem:[%s156 + $0xae8] sm:$0xff]
        %v533 = vld [vmem:[%s156 + $0xaf0] sm:$0xff]
        %v534 = vld [vmem:[%s156 + $0xaf8] sm:$0xff]
        %v535 = vld [vmem:[%s156 + $0xb00] sm:$0xff]
        %v536 = vld [vmem:[%s156 + $0xb08] sm:$0xff]
        %v537 = vld [vmem:[%s156 + $0xb10] sm:$0xff]
        %v538 = vld [vmem:[%s156 + $0xb18] sm:$0xff]
        %v539 = vld [vmem:[%s156 + $0xb20] sm:$0xff]
        %v540 = vld [vmem:[%s156 + $0xb28] sm:$0xff]
        %v541 = vld [vmem:[%s156 + $0xb30] sm:$0xff]
        %v542 = vld [vmem:[%s156 + $0xb38] sm:$0xff]
        %v543 = vld [vmem:[%s156 + $0xb40] sm:$0xff]
        %v544 = vld [vmem:[%s156 + $0xb48] sm:$0xff]
        %v545 = vld [vmem:[%s156 + $0xb50] sm:$0xff]
        %v546 = vld [vmem:[%s156 + $0xb58] sm:$0xff]
        %v547 = vld [vmem:[%s156 + $0xb60] sm:$0xff]
        %v548 = vld [vmem:[%s156 + $0xb68] sm:$0xff]
        %v549 = vld [vmem:[%s156 + $0xb70] sm:$0xff]
        %v550 = vld [vmem:[%s156 + $0xb78] sm:$0xff]
        %v551 = vld [vmem:[%s156 + $0xb80] sm:$0xff]
        %v552 = vld [vmem:[%s156 + $0xb88] sm:$0xff]
        %v553 = vld [vmem:[%s156 + $0xb90] sm:$0xff]
        %v554 = vld [vmem:[%s156 + $0xb98] sm:$0xff]
        %v555 = vld [vmem:[%s156 + $0xba0] sm:$0xff]
        %v556 = vld [vmem:[%s156 + $0xba8] sm:$0xff]
        %v557 = vld [vmem:[%s156 + $0xbb0] sm:$0xff]
        %v558 = vld [vmem:[%s156 + $0xbb8] sm:$0xff]
        %v559 = vld [vmem:[%s156 + $0xbc0] sm:$0xff]
        %v560 = vld [vmem:[%s156 + $0xbc8] sm:$0xff]
        %v561 = vld [vmem:[%s156 + $0xbd0] sm:$0xff]
        %v562 = vld [vmem:[%s156 + $0xbd8] sm:$0xff]
        %v563 = vld [vmem:[%s156 + $0xbe0] sm:$0xff]
        %v564 = vld [vmem:[%s156 + $0xbe8] sm:$0xff]
        %v565 = vld [vmem:[%s156 + $0xbf0] sm:$0xff]
        %v566 = vld [vmem:[%s156 + $0xbf8] sm:$0xff]
        %v567 = vld [vmem:[%s156 + $0xc00] sm:$0xff]
        %v568 = vld [vmem:[%s156 + $0xc08] sm:$0xff]
        %v569 = vld [vmem:[%s156 + $0xc10] sm:$0xff]
        %v570 = vld [vmem:[%s156 + $0xc18] sm:$0xff]
        %v571 = vld [vmem:[%s156 + $0xc20] sm:$0xff]
        %v572 = vld [vmem:[%s156 + $0xc28] sm:$0xff]
        %v573 = vld [vmem:[%s156 + $0xc30] sm:$0xff]
        %v574 = vld [vmem:[%s156 + $0xc38] sm:$0xff]
        %v575 = vld [vmem:[%s156 + $0xc40] sm:$0xff]
        %v576 = vld [vmem:[%s156 + $0xc48] sm:$0xff]
        %v577 = vld [vmem:[%s156 + $0xc50] sm:$0xff]
        %v578 = vld [vmem:[%s156 + $0xc58] sm:$0xff]
        %v579 = vld [vmem:[%s156 + $0xc60] sm:$0xff]
        %v580 = vld [vmem:[%s156 + $0xc68] sm:$0xff]
        %v581 = vld [vmem:[%s156 + $0xc70] sm:$0xff]
        %v582 = vld [vmem:[%s156 + $0xc78] sm:$0xff]
        %v583 = vld [vmem:[%s156 + $0xc80] sm:$0xff]
        %v584 = vld [vmem:[%s156 + $0xc88] sm:$0xff]
        %v585 = vld [vmem:[%s156 + $0xc90] sm:$0xff]
        %v586 = vld [vmem:[%s156 + $0xc98] sm:$0xff]
        %v587 = vld [vmem:[%s156 + $0xca0] sm:$0xff]
        %v588 = vld [vmem:[%s156 + $0xca8] sm:$0xff]
        %v589 = vld [vmem:[%s156 + $0xcb0] sm:$0xff]
        %v590 = vld [vmem:[%s156 + $0xcb8] sm:$0xff]
        %v591 = vld [vmem:[%s156 + $0xcc0] sm:$0xff]
        %v592 = vld [vmem:[%s156 + $0xcc8] sm:$0xff]
        %v593 = vld [vmem:[%s156 + $0xcd0] sm:$0xff]
        %v594 = vld [vmem:[%s156 + $0xcd8] sm:$0xff]
        %v595 = vld [vmem:[%s156 + $0xce0] sm:$0xff]
        %v596 = vld [vmem:[%s156 + $0xce8] sm:$0xff]
        %v597 = vld [vmem:[%s156 + $0xcf0] sm:$0xff]
        %v598 = vld [vmem:[%s156 + $0xcf8] sm:$0xff]
        %v599 = vld [vmem:[%s156 + $0xd00] sm:$0xff]
        %v600 = vld [vmem:[%s156 + $0xd08] sm:$0xff]
        %v601 = vld [vmem:[%s156 + $0xd10] sm:$0xff]
        %v602 = vld [vmem:[%s156 + $0xd18] sm:$0xff]
        %v603 = vld [vmem:[%s156 + $0xd20] sm:$0xff]
        %v604 = vld [vmem:[%s156 + $0xd28] sm:$0xff]
        %v605 = vld [vmem:[%s156 + $0xd30] sm:$0xff]
        %v606 = vld [vmem:[%s156 + $0xd38] sm:$0xff]
        %v607 = vld [vmem:[%s156 + $0xd40] sm:$0xff]
        %v608 = vld [vmem:[%s156 + $0xd48] sm:$0xff]
        %v609 = vld [vmem:[%s156 + $0xd50] sm:$0xff]
        %v610 = vld [vmem:[%s156 + $0xd58] sm:$0xff]
        %v611 = vld [vmem:[%s156 + $0xd60] sm:$0xff]
        %v612 = vld [vmem:[%s156 + $0xd68] sm:$0xff]
        %v613 = vld [vmem:[%s156 + $0xd70] sm:$0xff]
        %v614 = vld [vmem:[%s156 + $0xd78] sm:$0xff]
        %v615 = vld [vmem:[%s156 + $0xd80] sm:$0xff]
        %v616 = vld [vmem:[%s156 + $0xd88] sm:$0xff]
        %v617 = vld [vmem:[%s156 + $0xd90] sm:$0xff]
        %v618 = vld [vmem:[%s156 + $0xd98] sm:$0xff]
        %v619 = vld [vmem:[%s156 + $0xda0] sm:$0xff]
        %v620 = vld [vmem:[%s156 + $0xda8] sm:$0xff]
        %v621 = vld [vmem:[%s156 + $0xdb0] sm:$0xff]
        %v622 = vld [vmem:[%s156 + $0xdb8] sm:$0xff]
        %v623 = vld [vmem:[%s156 + $0xdc0] sm:$0xff]
        %v624 = vld [vmem:[%s156 + $0xdc8] sm:$0xff]
        %v625 = vld [vmem:[%s156 + $0xdd0] sm:$0xff]
        %v626 = vld [vmem:[%s156 + $0xdd8] sm:$0xff]
        %v627 = vld [vmem:[%s156 + $0xde0] sm:$0xff]
        %v628 = vld [vmem:[%s156 + $0xde8] sm:$0xff]
        %v629 = vld [vmem:[%s156 + $0xdf0] sm:$0xff]
        %v630 = vld [vmem:[%s156 + $0xdf8] sm:$0xff]
        %v631 = vld [vmem:[%s156 + $0xe00] sm:$0xff]
        %v632 = vld [vmem:[%s156 + $0xe08] sm:$0xff]
        %v633 = vld [vmem:[%s156 + $0xe10] sm:$0xff]
        %v634 = vld [vmem:[%s156 + $0xe18] sm:$0xff]
        %v635 = vld [vmem:[%s156 + $0xe20] sm:$0xff]
        %v636 = vld [vmem:[%s156 + $0xe28] sm:$0xff]
        %v637 = vld [vmem:[%s156 + $0xe30] sm:$0xff]
        %v638 = vld [vmem:[%s156 + $0xe38] sm:$0xff]
        %v639 = vld [vmem:[%s156 + $0xe40] sm:$0xff]
        %v640 = vld [vmem:[%s156 + $0xe48] sm:$0xff]
        %v641 = vld [vmem:[%s156 + $0xe50] sm:$0xff]
        %v642 = vld [vmem:[%s156 + $0xe58] sm:$0xff]
        %v643 = vld [vmem:[%s156 + $0xe60] sm:$0xff]
        %v644 = vld [vmem:[%s156 + $0xe68] sm:$0xff]
        %v645 = vld [vmem:[%s156 + $0xe70] sm:$0xff]
        %v646 = vld [vmem:[%s156 + $0xe78] sm:$0xff]
        %v647 = vld [vmem:[%s156 + $0xe80] sm:$0xff]
        %v648 = vld [vmem:[%s156 + $0xe88] sm:$0xff]
        %v649 = vld [vmem:[%s156 + $0xe90] sm:$0xff]
        %v650 = vld [vmem:[%s156 + $0xe98] sm:$0xff]
        %v651 = vld [vmem:[%s156 + $0xea0] sm:$0xff]
        %v652 = vld [vmem:[%s156 + $0xea8] sm:$0xff]
        %v653 = vld [vmem:[%s156 + $0xeb0] sm:$0xff]
        %v654 = vld [vmem:[%s156 + $0xeb8] sm:$0xff]
        %v655 = vld [vmem:[%s156 + $0xec0] sm:$0xff]
        %v656 = vld [vmem:[%s156 + $0xec8] sm:$0xff]
        %v657 = vld [vmem:[%s156 + $0xed0] sm:$0xff]
        %v658 = vld [vmem:[%s156 + $0xed8] sm:$0xff]
        %v659 = vld [vmem:[%s156 + $0xee0] sm:$0xff]
        %v660 = vld [vmem:[%s156 + $0xee8] sm:$0xff]
        %v661 = vld [vmem:[%s156 + $0xef0] sm:$0xff]
        %v662 = vld [vmem:[%s156 + $0xef8] sm:$0xff]
        %v663 = vld [vmem:[%s156 + $0xf00] sm:$0xff]
        %v664 = vld [vmem:[%s156 + $0xf08] sm:$0xff]
        %v665 = vld [vmem:[%s156 + $0xf10] sm:$0xff]
        %v666 = vld [vmem:[%s156 + $0xf18] sm:$0xff]
        %v667 = vld [vmem:[%s156 + $0xf20] sm:$0xff]
        %v668 = vld [vmem:[%s156 + $0xf28] sm:$0xff]
        %v669 = vld [vmem:[%s156 + $0xf30] sm:$0xff]
        %v670 = vld [vmem:[%s156 + $0xf38] sm:$0xff]
        %v671 = vld [vmem:[%s156 + $0xf40] sm:$0xff]
        %v672 = vld [vmem:[%s156 + $0xf48] sm:$0xff]
        %v673 = vld [vmem:[%s156 + $0xf50] sm:$0xff]
        %v674 = vld [vmem:[%s156 + $0xf58] sm:$0xff]
        %v675 = vld [vmem:[%s156 + $0xf60] sm:$0xff]
        %v676 = vld [vmem:[%s156 + $0xf68] sm:$0xff]
        %v677 = vld [vmem:[%s156 + $0xf70] sm:$0xff]
        %v678 = vld [vmem:[%s156 + $0xf78] sm:$0xff]
        %v679 = vld [vmem:[%s156 + $0xf80] sm:$0xff]
        %v680 = vld [vmem:[%s156 + $0xf88] sm:$0xff]
        %v681 = vld [vmem:[%s156 + $0xf90] sm:$0xff]
        %v682 = vld [vmem:[%s156 + $0xf98] sm:$0xff]
        %v683 = vld [vmem:[%s156 + $0xfa0] sm:$0xff]
        %v684 = vld [vmem:[%s156 + $0xfa8] sm:$0xff]
        %v685 = vld [vmem:[%s156 + $0xfb0] sm:$0xff]
        %v686 = vld [vmem:[%s156 + $0xfb8] sm:$0xff]
        %v687 = vld [vmem:[%s156 + $0xfc0] sm:$0xff]
        %v688 = vld [vmem:[%s156 + $0xfc8] sm:$0xff]
        %v689 = vld [vmem:[%s156 + $0xfd0] sm:$0xff]
        %v690 = vld [vmem:[%s156 + $0xfd8] sm:$0xff]
        %v691 = vld [vmem:[%s156 + $0xfe0] sm:$0xff]
        %v692 = vld [vmem:[%s156 + $0xfe8] sm:$0xff]
        %v693 = vld [vmem:[%s156 + $0xff0] sm:$0xff]
        %v694 = vld [vmem:[%s156 + $0xff8] sm:$0xff]
        %v695 = vstv %s181
        %v696 = vmul.f32 %v695, %v183
        %v697 = vmul.f32 %v695, %v184
        %v698 = vmul.f32 %v695, %v185
        %v699 = vmul.f32 %v695, %v186
        %v700 = vmul.f32 %v695, %v187
        %v701 = vmul.f32 %v695, %v188
        %v702 = vmul.f32 %v695, %v189
        %v703 = vmul.f32 %v695, %v190
        %v704 = vmul.f32 %v695, %v191
        %v705 = vmul.f32 %v695, %v192
        %v706 = vmul.f32 %v695, %v193
        %v707 = vmul.f32 %v695, %v194
        %v708 = vmul.f32 %v695, %v195
        %v709 = vmul.f32 %v695, %v196
        %v710 = vmul.f32 %v695, %v197
        %v711 = vmul.f32 %v695, %v198
        %v712 = vmul.f32 %v695, %v199
        %v713 = vmul.f32 %v695, %v200
        %v714 = vmul.f32 %v695, %v201
        %v715 = vmul.f32 %v695, %v202
        %v716 = vmul.f32 %v695, %v203
        %v717 = vmul.f32 %v695, %v204
        %v718 = vmul.f32 %v695, %v205
        %v719 = vmul.f32 %v695, %v206
        %v720 = vmul.f32 %v695, %v207
        %v721 = vmul.f32 %v695, %v208
        %v722 = vmul.f32 %v695, %v209
        %v723 = vmul.f32 %v695, %v210
        %v724 = vmul.f32 %v695, %v211
        %v725 = vmul.f32 %v695, %v212
        %v726 = vmul.f32 %v695, %v213
        %v727 = vmul.f32 %v695, %v214
        %v728 = vmul.f32 %v695, %v215
        %v729 = vmul.f32 %v695, %v216
        %v730 = vmul.f32 %v695, %v217
        %v731 = vmul.f32 %v695, %v218
        %v732 = vmul.f32 %v695, %v219
        %v733 = vmul.f32 %v695, %v220
        %v734 = vmul.f32 %v695, %v221
        %v735 = vmul.f32 %v695, %v222
        %v736 = vmul.f32 %v695, %v223
        %v737 = vmul.f32 %v695, %v224
        %v738 = vmul.f32 %v695, %v225
        %v739 = vmul.f32 %v695, %v226
        %v740 = vmul.f32 %v695, %v227
        %v741 = vmul.f32 %v695, %v228
        %v742 = vmul.f32 %v695, %v229
        %v743 = vmul.f32 %v695, %v230
        %v744 = vmul.f32 %v695, %v231
        %v745 = vmul.f32 %v695, %v232
        %v746 = vmul.f32 %v695, %v233
        %v747 = vmul.f32 %v695, %v234
        %v748 = vmul.f32 %v695, %v235
        %v749 = vmul.f32 %v695, %v236
        %v750 = vmul.f32 %v695, %v237
        %v751 = vmul.f32 %v695, %v238
        %v752 = vmul.f32 %v695, %v239
        %v753 = vmul.f32 %v695, %v240
        %v754 = vmul.f32 %v695, %v241
        %v755 = vmul.f32 %v695, %v242
        %v756 = vmul.f32 %v695, %v243
        %v757 = vmul.f32 %v695, %v244
        %v758 = vmul.f32 %v695, %v245
        %v759 = vmul.f32 %v695, %v246
        %v760 = vmul.f32 %v695, %v247
        %v761 = vmul.f32 %v695, %v248
        %v762 = vmul.f32 %v695, %v249
        %v763 = vmul.f32 %v695, %v250
        %v764 = vmul.f32 %v695, %v251
        %v765 = vmul.f32 %v695, %v252
        %v766 = vmul.f32 %v695, %v253
        %v767 = vmul.f32 %v695, %v254
        %v768 = vmul.f32 %v695, %v255
        %v769 = vmul.f32 %v695, %v256
        %v770 = vmul.f32 %v695, %v257
        %v771 = vmul.f32 %v695, %v258
        %v772 = vmul.f32 %v695, %v259
        %v773 = vmul.f32 %v695, %v260
        %v774 = vmul.f32 %v695, %v261
        %v775 = vmul.f32 %v695, %v262
        %v776 = vmul.f32 %v695, %v263
        %v777 = vmul.f32 %v695, %v264
        %v778 = vmul.f32 %v695, %v265
        %v779 = vmul.f32 %v695, %v266
        %v780 = vmul.f32 %v695, %v267
        %v781 = vmul.f32 %v695, %v268
        %v782 = vmul.f32 %v695, %v269
        %v783 = vmul.f32 %v695, %v270
        %v784 = vmul.f32 %v695, %v271
        %v785 = vmul.f32 %v695, %v272
        %v786 = vmul.f32 %v695, %v273
        %v787 = vmul.f32 %v695, %v274
        %v788 = vmul.f32 %v695, %v275
        %v789 = vmul.f32 %v695, %v276
        %v790 = vmul.f32 %v695, %v277
        %v791 = vmul.f32 %v695, %v278
        %v792 = vmul.f32 %v695, %v279
        %v793 = vmul.f32 %v695, %v280
        %v794 = vmul.f32 %v695, %v281
        %v795 = vmul.f32 %v695, %v282
        %v796 = vmul.f32 %v695, %v283
        %v797 = vmul.f32 %v695, %v284
        %v798 = vmul.f32 %v695, %v285
        %v799 = vmul.f32 %v695, %v286
        %v800 = vmul.f32 %v695, %v287
        %v801 = vmul.f32 %v695, %v288
        %v802 = vmul.f32 %v695, %v289
        %v803 = vmul.f32 %v695, %v290
        %v804 = vmul.f32 %v695, %v291
        %v805 = vmul.f32 %v695, %v292
        %v806 = vmul.f32 %v695, %v293
        %v807 = vmul.f32 %v695, %v294
        %v808 = vmul.f32 %v695, %v295
        %v809 = vmul.f32 %v695, %v296
        %v810 = vmul.f32 %v695, %v297
        %v811 = vmul.f32 %v695, %v298
        %v812 = vmul.f32 %v695, %v299
        %v813 = vmul.f32 %v695, %v300
        %v814 = vmul.f32 %v695, %v301
        %v815 = vmul.f32 %v695, %v302
        %v816 = vmul.f32 %v695, %v303
        %v817 = vmul.f32 %v695, %v304
        %v818 = vmul.f32 %v695, %v305
        %v819 = vmul.f32 %v695, %v306
        %v820 = vmul.f32 %v695, %v307
        %v821 = vmul.f32 %v695, %v308
        %v822 = vmul.f32 %v695, %v309
        %v823 = vmul.f32 %v695, %v310
        %v824 = vmul.f32 %v695, %v311
        %v825 = vmul.f32 %v695, %v312
        %v826 = vmul.f32 %v695, %v313
        %v827 = vmul.f32 %v695, %v314
        %v828 = vmul.f32 %v695, %v315
        %v829 = vmul.f32 %v695, %v316
        %v830 = vmul.f32 %v695, %v317
        %v831 = vmul.f32 %v695, %v318
        %v832 = vmul.f32 %v695, %v319
        %v833 = vmul.f32 %v695, %v320
        %v834 = vmul.f32 %v695, %v321
        %v835 = vmul.f32 %v695, %v322
        %v836 = vmul.f32 %v695, %v323
        %v837 = vmul.f32 %v695, %v324
        %v838 = vmul.f32 %v695, %v325
        %v839 = vmul.f32 %v695, %v326
        %v840 = vmul.f32 %v695, %v327
        %v841 = vmul.f32 %v695, %v328
        %v842 = vmul.f32 %v695, %v329
        %v843 = vmul.f32 %v695, %v330
        %v844 = vmul.f32 %v695, %v331
        %v845 = vmul.f32 %v695, %v332
        %v846 = vmul.f32 %v695, %v333
        %v847 = vmul.f32 %v695, %v334
        %v848 = vmul.f32 %v695, %v335
        %v849 = vmul.f32 %v695, %v336
        %v850 = vmul.f32 %v695, %v337
        %v851 = vmul.f32 %v695, %v338
        %v852 = vmul.f32 %v695, %v339
        %v853 = vmul.f32 %v695, %v340
        %v854 = vmul.f32 %v695, %v341
        %v855 = vmul.f32 %v695, %v342
        %v856 = vmul.f32 %v695, %v343
        %v857 = vmul.f32 %v695, %v344
        %v858 = vmul.f32 %v695, %v345
        %v859 = vmul.f32 %v695, %v346
        %v860 = vmul.f32 %v695, %v347
        %v861 = vmul.f32 %v695, %v348
        %v862 = vmul.f32 %v695, %v349
        %v863 = vmul.f32 %v695, %v350
        %v864 = vmul.f32 %v695, %v351
        %v865 = vmul.f32 %v695, %v352
        %v866 = vmul.f32 %v695, %v353
        %v867 = vmul.f32 %v695, %v354
        %v868 = vmul.f32 %v695, %v355
        %v869 = vmul.f32 %v695, %v356
        %v870 = vmul.f32 %v695, %v357
        %v871 = vmul.f32 %v695, %v358
        %v872 = vmul.f32 %v695, %v359
        %v873 = vmul.f32 %v695, %v360
        %v874 = vmul.f32 %v695, %v361
        %v875 = vmul.f32 %v695, %v362
        %v876 = vmul.f32 %v695, %v363
        %v877 = vmul.f32 %v695, %v364
        %v878 = vmul.f32 %v695, %v365
        %v879 = vmul.f32 %v695, %v366
        %v880 = vmul.f32 %v695, %v367
        %v881 = vmul.f32 %v695, %v368
        %v882 = vmul.f32 %v695, %v369
        %v883 = vmul.f32 %v695, %v370
        %v884 = vmul.f32 %v695, %v371
        %v885 = vmul.f32 %v695, %v372
        %v886 = vmul.f32 %v695, %v373
        %v887 = vmul.f32 %v695, %v374
        %v888 = vmul.f32 %v695, %v375
        %v889 = vmul.f32 %v695, %v376
        %v890 = vmul.f32 %v695, %v377
        %v891 = vmul.f32 %v695, %v378
        %v892 = vmul.f32 %v695, %v379
        %v893 = vmul.f32 %v695, %v380
        %v894 = vmul.f32 %v695, %v381
        %v895 = vmul.f32 %v695, %v382
        %v896 = vmul.f32 %v695, %v383
        %v897 = vmul.f32 %v695, %v384
        %v898 = vmul.f32 %v695, %v385
        %v899 = vmul.f32 %v695, %v386
        %v900 = vmul.f32 %v695, %v387
        %v901 = vmul.f32 %v695, %v388
        %v902 = vmul.f32 %v695, %v389
        %v903 = vmul.f32 %v695, %v390
        %v904 = vmul.f32 %v695, %v391
        %v905 = vmul.f32 %v695, %v392
        %v906 = vmul.f32 %v695, %v393
        %v907 = vmul.f32 %v695, %v394
        %v908 = vmul.f32 %v695, %v395
        %v909 = vmul.f32 %v695, %v396
        %v910 = vmul.f32 %v695, %v397
        %v911 = vmul.f32 %v695, %v398
        %v912 = vmul.f32 %v695, %v399
        %v913 = vmul.f32 %v695, %v400
        %v914 = vmul.f32 %v695, %v401
        %v915 = vmul.f32 %v695, %v402
        %v916 = vmul.f32 %v695, %v403
        %v917 = vmul.f32 %v695, %v404
        %v918 = vmul.f32 %v695, %v405
        %v919 = vmul.f32 %v695, %v406
        %v920 = vmul.f32 %v695, %v407
        %v921 = vmul.f32 %v695, %v408
        %v922 = vmul.f32 %v695, %v409
        %v923 = vmul.f32 %v695, %v410
        %v924 = vmul.f32 %v695, %v411
        %v925 = vmul.f32 %v695, %v412
        %v926 = vmul.f32 %v695, %v413
        %v927 = vmul.f32 %v695, %v414
        %v928 = vmul.f32 %v695, %v415
        %v929 = vmul.f32 %v695, %v416
        %v930 = vmul.f32 %v695, %v417
        %v931 = vmul.f32 %v695, %v418
        %v932 = vmul.f32 %v695, %v419
        %v933 = vmul.f32 %v695, %v420
        %v934 = vmul.f32 %v695, %v421
        %v935 = vmul.f32 %v695, %v422
        %v936 = vmul.f32 %v695, %v423
        %v937 = vmul.f32 %v695, %v424
        %v938 = vmul.f32 %v695, %v425
        %v939 = vmul.f32 %v695, %v426
        %v940 = vmul.f32 %v695, %v427
        %v941 = vmul.f32 %v695, %v428
        %v942 = vmul.f32 %v695, %v429
        %v943 = vmul.f32 %v695, %v430
        %v944 = vmul.f32 %v695, %v431
        %v945 = vmul.f32 %v695, %v432
        %v946 = vmul.f32 %v695, %v433
        %v947 = vmul.f32 %v695, %v434
        %v948 = vmul.f32 %v695, %v435
        %v949 = vmul.f32 %v695, %v436
        %v950 = vmul.f32 %v695, %v437
        %v951 = vmul.f32 %v695, %v438
        %v952 = vmul.f32 %v695, %v439
        %v953 = vmul.f32 %v695, %v440
        %v954 = vmul.f32 %v695, %v441
        %v955 = vmul.f32 %v695, %v442
        %v956 = vmul.f32 %v695, %v443
        %v957 = vmul.f32 %v695, %v444
        %v958 = vmul.f32 %v695, %v445
        %v959 = vmul.f32 %v695, %v446
        %v960 = vmul.f32 %v695, %v447
        %v961 = vmul.f32 %v695, %v448
        %v962 = vmul.f32 %v695, %v449
        %v963 = vmul.f32 %v695, %v450
        %v964 = vmul.f32 %v695, %v451
        %v965 = vmul.f32 %v695, %v452
        %v966 = vmul.f32 %v695, %v453
        %v967 = vmul.f32 %v695, %v454
        %v968 = vmul.f32 %v695, %v455
        %v969 = vmul.f32 %v695, %v456
        %v970 = vmul.f32 %v695, %v457
        %v971 = vmul.f32 %v695, %v458
        %v972 = vmul.f32 %v695, %v459
        %v973 = vmul.f32 %v695, %v460
        %v974 = vmul.f32 %v695, %v461
        %v975 = vmul.f32 %v695, %v462
        %v976 = vmul.f32 %v695, %v463
        %v977 = vmul.f32 %v695, %v464
        %v978 = vmul.f32 %v695, %v465
        %v979 = vmul.f32 %v695, %v466
        %v980 = vmul.f32 %v695, %v467
        %v981 = vmul.f32 %v695, %v468
        %v982 = vmul.f32 %v695, %v469
        %v983 = vmul.f32 %v695, %v470
        %v984 = vmul.f32 %v695, %v471
        %v985 = vmul.f32 %v695, %v472
        %v986 = vmul.f32 %v695, %v473
        %v987 = vmul.f32 %v695, %v474
        %v988 = vmul.f32 %v695, %v475
        %v989 = vmul.f32 %v695, %v476
        %v990 = vmul.f32 %v695, %v477
        %v991 = vmul.f32 %v695, %v478
        %v992 = vmul.f32 %v695, %v479
        %v993 = vmul.f32 %v695, %v480
        %v994 = vmul.f32 %v695, %v481
        %v995 = vmul.f32 %v695, %v482
        %v996 = vmul.f32 %v695, %v483
        %v997 = vmul.f32 %v695, %v484
        %v998 = vmul.f32 %v695, %v485
        %v999 = vmul.f32 %v695, %v486
        %v1000 = vmul.f32 %v695, %v487
        %v1001 = vmul.f32 %v695, %v488
        %v1002 = vmul.f32 %v695, %v489
        %v1003 = vmul.f32 %v695, %v490
        %v1004 = vmul.f32 %v695, %v491
        %v1005 = vmul.f32 %v695, %v492
        %v1006 = vmul.f32 %v695, %v493
        %v1007 = vmul.f32 %v695, %v494
        %v1008 = vmul.f32 %v695, %v495
        %v1009 = vmul.f32 %v695, %v496
        %v1010 = vmul.f32 %v695, %v497
        %v1011 = vmul.f32 %v695, %v498
        %v1012 = vmul.f32 %v695, %v499
        %v1013 = vmul.f32 %v695, %v500
        %v1014 = vmul.f32 %v695, %v501
        %v1015 = vmul.f32 %v695, %v502
        %v1016 = vmul.f32 %v695, %v503
        %v1017 = vmul.f32 %v695, %v504
        %v1018 = vmul.f32 %v695, %v505
        %v1019 = vmul.f32 %v695, %v506
        %v1020 = vmul.f32 %v695, %v507
        %v1021 = vmul.f32 %v695, %v508
        %v1022 = vmul.f32 %v695, %v509
        %v1023 = vmul.f32 %v695, %v510
        %v1024 = vmul.f32 %v695, %v511
        %v1025 = vmul.f32 %v695, %v512
        %v1026 = vmul.f32 %v695, %v513
        %v1027 = vmul.f32 %v695, %v514
        %v1028 = vmul.f32 %v695, %v515
        %v1029 = vmul.f32 %v695, %v516
        %v1030 = vmul.f32 %v695, %v517
        %v1031 = vmul.f32 %v695, %v518
        %v1032 = vmul.f32 %v695, %v519
        %v1033 = vmul.f32 %v695, %v520
        %v1034 = vmul.f32 %v695, %v521
        %v1035 = vmul.f32 %v695, %v522
        %v1036 = vmul.f32 %v695, %v523
        %v1037 = vmul.f32 %v695, %v524
        %v1038 = vmul.f32 %v695, %v525
        %v1039 = vmul.f32 %v695, %v526
        %v1040 = vmul.f32 %v695, %v527
        %v1041 = vmul.f32 %v695, %v528
        %v1042 = vmul.f32 %v695, %v529
        %v1043 = vmul.f32 %v695, %v530
        %v1044 = vmul.f32 %v695, %v531
        %v1045 = vmul.f32 %v695, %v532
        %v1046 = vmul.f32 %v695, %v533
        %v1047 = vmul.f32 %v695, %v534
        %v1048 = vmul.f32 %v695, %v535
        %v1049 = vmul.f32 %v695, %v536
        %v1050 = vmul.f32 %v695, %v537
        %v1051 = vmul.f32 %v695, %v538
        %v1052 = vmul.f32 %v695, %v539
        %v1053 = vmul.f32 %v695, %v540
        %v1054 = vmul.f32 %v695, %v541
        %v1055 = vmul.f32 %v695, %v542
        %v1056 = vmul.f32 %v695, %v543
        %v1057 = vmul.f32 %v695, %v544
        %v1058 = vmul.f32 %v695, %v545
        %v1059 = vmul.f32 %v695, %v546
        %v1060 = vmul.f32 %v695, %v547
        %v1061 = vmul.f32 %v695, %v548
        %v1062 = vmul.f32 %v695, %v549
        %v1063 = vmul.f32 %v695, %v550
        %v1064 = vmul.f32 %v695, %v551
        %v1065 = vmul.f32 %v695, %v552
        %v1066 = vmul.f32 %v695, %v553
        %v1067 = vmul.f32 %v695, %v554
        %v1068 = vmul.f32 %v695, %v555
        %v1069 = vmul.f32 %v695, %v556
        %v1070 = vmul.f32 %v695, %v557
        %v1071 = vmul.f32 %v695, %v558
        %v1072 = vmul.f32 %v695, %v559
        %v1073 = vmul.f32 %v695, %v560
        %v1074 = vmul.f32 %v695, %v561
        %v1075 = vmul.f32 %v695, %v562
        %v1076 = vmul.f32 %v695, %v563
        %v1077 = vmul.f32 %v695, %v564
        %v1078 = vmul.f32 %v695, %v565
        %v1079 = vmul.f32 %v695, %v566
        %v1080 = vmul.f32 %v695, %v567
        %v1081 = vmul.f32 %v695, %v568
        %v1082 = vmul.f32 %v695, %v569
        %v1083 = vmul.f32 %v695, %v570
        %v1084 = vmul.f32 %v695, %v571
        %v1085 = vmul.f32 %v695, %v572
        %v1086 = vmul.f32 %v695, %v573
        %v1087 = vmul.f32 %v695, %v574
        %v1088 = vmul.f32 %v695, %v575
        %v1089 = vmul.f32 %v695, %v576
        %v1090 = vmul.f32 %v695, %v577
        %v1091 = vmul.f32 %v695, %v578
        %v1092 = vmul.f32 %v695, %v579
        %v1093 = vmul.f32 %v695, %v580
        %v1094 = vmul.f32 %v695, %v581
        %v1095 = vmul.f32 %v695, %v582
        %v1096 = vmul.f32 %v695, %v583
        %v1097 = vmul.f32 %v695, %v584
        %v1098 = vmul.f32 %v695, %v585
        %v1099 = vmul.f32 %v695, %v586
        %v1100 = vmul.f32 %v695, %v587
        %v1101 = vmul.f32 %v695, %v588
        %v1102 = vmul.f32 %v695, %v589
        %v1103 = vmul.f32 %v695, %v590
        %v1104 = vmul.f32 %v695, %v591
        %v1105 = vmul.f32 %v695, %v592
        %v1106 = vmul.f32 %v695, %v593
        %v1107 = vmul.f32 %v695, %v594
        %v1108 = vmul.f32 %v695, %v595
        %v1109 = vmul.f32 %v695, %v596
        %v1110 = vmul.f32 %v695, %v597
        %v1111 = vmul.f32 %v695, %v598
        %v1112 = vmul.f32 %v695, %v599
        %v1113 = vmul.f32 %v695, %v600
        %v1114 = vmul.f32 %v695, %v601
        %v1115 = vmul.f32 %v695, %v602
        %v1116 = vmul.f32 %v695, %v603
        %v1117 = vmul.f32 %v695, %v604
        %v1118 = vmul.f32 %v695, %v605
        %v1119 = vmul.f32 %v695, %v606
        %v1120 = vmul.f32 %v695, %v607
        %v1121 = vmul.f32 %v695, %v608
        %v1122 = vmul.f32 %v695, %v609
        %v1123 = vmul.f32 %v695, %v610
        %v1124 = vmul.f32 %v695, %v611
        %v1125 = vmul.f32 %v695, %v612
        %v1126 = vmul.f32 %v695, %v613
        %v1127 = vmul.f32 %v695, %v614
        %v1128 = vmul.f32 %v695, %v615
        %v1129 = vmul.f32 %v695, %v616
        %v1130 = vmul.f32 %v695, %v617
        %v1131 = vmul.f32 %v695, %v618
        %v1132 = vmul.f32 %v695, %v619
        %v1133 = vmul.f32 %v695, %v620
        %v1134 = vmul.f32 %v695, %v621
        %v1135 = vmul.f32 %v695, %v622
        %v1136 = vmul.f32 %v695, %v623
        %v1137 = vmul.f32 %v695, %v624
        %v1138 = vmul.f32 %v695, %v625
        %v1139 = vmul.f32 %v695, %v626
        %v1140 = vmul.f32 %v695, %v627
        %v1141 = vmul.f32 %v695, %v628
        %v1142 = vmul.f32 %v695, %v629
        %v1143 = vmul.f32 %v695, %v630
        %v1144 = vmul.f32 %v695, %v631
        %v1145 = vmul.f32 %v695, %v632
        %v1146 = vmul.f32 %v695, %v633
        %v1147 = vmul.f32 %v695, %v634
        %v1148 = vmul.f32 %v695, %v635
        %v1149 = vmul.f32 %v695, %v636
        %v1150 = vmul.f32 %v695, %v637
        %v1151 = vmul.f32 %v695, %v638
        %v1152 = vmul.f32 %v695, %v639
        %v1153 = vmul.f32 %v695, %v640
        %v1154 = vmul.f32 %v695, %v641
        %v1155 = vmul.f32 %v695, %v642
        %v1156 = vmul.f32 %v695, %v643
        %v1157 = vmul.f32 %v695, %v644
        %v1158 = vmul.f32 %v695, %v645
        %v1159 = vmul.f32 %v695, %v646
        %v1160 = vmul.f32 %v695, %v647
        %v1161 = vmul.f32 %v695, %v648
        %v1162 = vmul.f32 %v695, %v649
        %v1163 = vmul.f32 %v695, %v650
        %v1164 = vmul.f32 %v695, %v651
        %v1165 = vmul.f32 %v695, %v652
        %v1166 = vmul.f32 %v695, %v653
        %v1167 = vmul.f32 %v695, %v654
        %v1168 = vmul.f32 %v695, %v655
        %v1169 = vmul.f32 %v695, %v656
        %v1170 = vmul.f32 %v695, %v657
        %v1171 = vmul.f32 %v695, %v658
        %v1172 = vmul.f32 %v695, %v659
        %v1173 = vmul.f32 %v695, %v660
        %v1174 = vmul.f32 %v695, %v661
        %v1175 = vmul.f32 %v695, %v662
        %v1176 = vmul.f32 %v695, %v663
        %v1177 = vmul.f32 %v695, %v664
        %v1178 = vmul.f32 %v695, %v665
        %v1179 = vmul.f32 %v695, %v666
        %v1180 = vmul.f32 %v695, %v667
        %v1181 = vmul.f32 %v695, %v668
        %v1182 = vmul.f32 %v695, %v669
        %v1183 = vmul.f32 %v695, %v670
        %v1184 = vmul.f32 %v695, %v671
        %v1185 = vmul.f32 %v695, %v672
        %v1186 = vmul.f32 %v695, %v673
        %v1187 = vmul.f32 %v695, %v674
        %v1188 = vmul.f32 %v695, %v675
        %v1189 = vmul.f32 %v695, %v676
        %v1190 = vmul.f32 %v695, %v677
        %v1191 = vmul.f32 %v695, %v678
        %v1192 = vmul.f32 %v695, %v679
        %v1193 = vmul.f32 %v695, %v680
        %v1194 = vmul.f32 %v695, %v681
        %v1195 = vmul.f32 %v695, %v682
        %v1196 = vmul.f32 %v695, %v683
        %v1197 = vmul.f32 %v695, %v684
        %v1198 = vmul.f32 %v695, %v685
        %v1199 = vmul.f32 %v695, %v686
        %v1200 = vmul.f32 %v695, %v687
        %v1201 = vmul.f32 %v695, %v688
        %v1202 = vmul.f32 %v695, %v689
        %v1203 = vmul.f32 %v695, %v690
        %v1204 = vmul.f32 %v695, %v691
        %v1205 = vmul.f32 %v695, %v692
        %v1206 = vmul.f32 %v695, %v693
        %v1207 = vmul.f32 %v695, %v694
        %v1208 = vstv %s182
        %v1209 = vadd.f32 %v696, %v1208
        %v1210 = vadd.f32 %v697, %v1208
        %v1211 = vadd.f32 %v698, %v1208
        %v1212 = vadd.f32 %v699, %v1208
        %v1213 = vadd.f32 %v700, %v1208
        %v1214 = vadd.f32 %v701, %v1208
        %v1215 = vadd.f32 %v702, %v1208
        %v1216 = vadd.f32 %v703, %v1208
        %v1217 = vadd.f32 %v704, %v1208
        %v1218 = vadd.f32 %v705, %v1208
        %v1219 = vadd.f32 %v706, %v1208
        %v1220 = vadd.f32 %v707, %v1208
        %v1221 = vadd.f32 %v708, %v1208
        %v1222 = vadd.f32 %v709, %v1208
        %v1223 = vadd.f32 %v710, %v1208
        %v1224 = vadd.f32 %v711, %v1208
        %v1225 = vadd.f32 %v712, %v1208
        %v1226 = vadd.f32 %v713, %v1208
        %v1227 = vadd.f32 %v714, %v1208
        %v1228 = vadd.f32 %v715, %v1208
        %v1229 = vadd.f32 %v716, %v1208
        %v1230 = vadd.f32 %v717, %v1208
        %v1231 = vadd.f32 %v718, %v1208
        %v1232 = vadd.f32 %v719, %v1208
        %v1233 = vadd.f32 %v720, %v1208
        %v1234 = vadd.f32 %v721, %v1208
        %v1235 = vadd.f32 %v722, %v1208
        %v1236 = vadd.f32 %v723, %v1208
        %v1237 = vadd.f32 %v724, %v1208
        %v1238 = vadd.f32 %v725, %v1208
        %v1239 = vadd.f32 %v726, %v1208
        %v1240 = vadd.f32 %v727, %v1208
        %v1241 = vadd.f32 %v728, %v1208
        %v1242 = vadd.f32 %v729, %v1208
        %v1243 = vadd.f32 %v730, %v1208
        %v1244 = vadd.f32 %v731, %v1208
        %v1245 = vadd.f32 %v732, %v1208
        %v1246 = vadd.f32 %v733, %v1208
        %v1247 = vadd.f32 %v734, %v1208
        %v1248 = vadd.f32 %v735, %v1208
        %v1249 = vadd.f32 %v736, %v1208
        %v1250 = vadd.f32 %v737, %v1208
        %v1251 = vadd.f32 %v738, %v1208
        %v1252 = vadd.f32 %v739, %v1208
        %v1253 = vadd.f32 %v740, %v1208
        %v1254 = vadd.f32 %v741, %v1208
        %v1255 = vadd.f32 %v742, %v1208
        %v1256 = vadd.f32 %v743, %v1208
        %v1257 = vadd.f32 %v744, %v1208
        %v1258 = vadd.f32 %v745, %v1208
        %v1259 = vadd.f32 %v746, %v1208
        %v1260 = vadd.f32 %v747, %v1208
        %v1261 = vadd.f32 %v748, %v1208
        %v1262 = vadd.f32 %v749, %v1208
        %v1263 = vadd.f32 %v750, %v1208
        %v1264 = vadd.f32 %v751, %v1208
        %v1265 = vadd.f32 %v752, %v1208
        %v1266 = vadd.f32 %v753, %v1208
        %v1267 = vadd.f32 %v754, %v1208
        %v1268 = vadd.f32 %v755, %v1208
        %v1269 = vadd.f32 %v756, %v1208
        %v1270 = vadd.f32 %v757, %v1208
        %v1271 = vadd.f32 %v758, %v1208
        %v1272 = vadd.f32 %v759, %v1208
        %v1273 = vadd.f32 %v760, %v1208
        %v1274 = vadd.f32 %v761, %v1208
        %v1275 = vadd.f32 %v762, %v1208
        %v1276 = vadd.f32 %v763, %v1208
        %v1277 = vadd.f32 %v764, %v1208
        %v1278 = vadd.f32 %v765, %v1208
        %v1279 = vadd.f32 %v766, %v1208
        %v1280 = vadd.f32 %v767, %v1208
        %v1281 = vadd.f32 %v768, %v1208
        %v1282 = vadd.f32 %v769, %v1208
        %v1283 = vadd.f32 %v770, %v1208
        %v1284 = vadd.f32 %v771, %v1208
        %v1285 = vadd.f32 %v772, %v1208
        %v1286 = vadd.f32 %v773, %v1208
        %v1287 = vadd.f32 %v774, %v1208
        %v1288 = vadd.f32 %v775, %v1208
        %v1289 = vadd.f32 %v776, %v1208
        %v1290 = vadd.f32 %v777, %v1208
        %v1291 = vadd.f32 %v778, %v1208
        %v1292 = vadd.f32 %v779, %v1208
        %v1293 = vadd.f32 %v780, %v1208
        %v1294 = vadd.f32 %v781, %v1208
        %v1295 = vadd.f32 %v782, %v1208
        %v1296 = vadd.f32 %v783, %v1208
        %v1297 = vadd.f32 %v784, %v1208
        %v1298 = vadd.f32 %v785, %v1208
        %v1299 = vadd.f32 %v786, %v1208
        %v1300 = vadd.f32 %v787, %v1208
        %v1301 = vadd.f32 %v788, %v1208
        %v1302 = vadd.f32 %v789, %v1208
        %v1303 = vadd.f32 %v790, %v1208
        %v1304 = vadd.f32 %v791, %v1208
        %v1305 = vadd.f32 %v792, %v1208
        %v1306 = vadd.f32 %v793, %v1208
        %v1307 = vadd.f32 %v794, %v1208
        %v1308 = vadd.f32 %v795, %v1208
        %v1309 = vadd.f32 %v796, %v1208
        %v1310 = vadd.f32 %v797, %v1208
        %v1311 = vadd.f32 %v798, %v1208
        %v1312 = vadd.f32 %v799, %v1208
        %v1313 = vadd.f32 %v800, %v1208
        %v1314 = vadd.f32 %v801, %v1208
        %v1315 = vadd.f32 %v802, %v1208
        %v1316 = vadd.f32 %v803, %v1208
        %v1317 = vadd.f32 %v804, %v1208
        %v1318 = vadd.f32 %v805, %v1208
        %v1319 = vadd.f32 %v806, %v1208
        %v1320 = vadd.f32 %v807, %v1208
        %v1321 = vadd.f32 %v808, %v1208
        %v1322 = vadd.f32 %v809, %v1208
        %v1323 = vadd.f32 %v810, %v1208
        %v1324 = vadd.f32 %v811, %v1208
        %v1325 = vadd.f32 %v812, %v1208
        %v1326 = vadd.f32 %v813, %v1208
        %v1327 = vadd.f32 %v814, %v1208
        %v1328 = vadd.f32 %v815, %v1208
        %v1329 = vadd.f32 %v816, %v1208
        %v1330 = vadd.f32 %v817, %v1208
        %v1331 = vadd.f32 %v818, %v1208
        %v1332 = vadd.f32 %v819, %v1208
        %v1333 = vadd.f32 %v820, %v1208
        %v1334 = vadd.f32 %v821, %v1208
        %v1335 = vadd.f32 %v822, %v1208
        %v1336 = vadd.f32 %v823, %v1208
        %v1337 = vadd.f32 %v824, %v1208
        %v1338 = vadd.f32 %v825, %v1208
        %v1339 = vadd.f32 %v826, %v1208
        %v1340 = vadd.f32 %v827, %v1208
        %v1341 = vadd.f32 %v828, %v1208
        %v1342 = vadd.f32 %v829, %v1208
        %v1343 = vadd.f32 %v830, %v1208
        %v1344 = vadd.f32 %v831, %v1208
        %v1345 = vadd.f32 %v832, %v1208
        %v1346 = vadd.f32 %v833, %v1208
        %v1347 = vadd.f32 %v834, %v1208
        %v1348 = vadd.f32 %v835, %v1208
        %v1349 = vadd.f32 %v836, %v1208
        %v1350 = vadd.f32 %v837, %v1208
        %v1351 = vadd.f32 %v838, %v1208
        %v1352 = vadd.f32 %v839, %v1208
        %v1353 = vadd.f32 %v840, %v1208
        %v1354 = vadd.f32 %v841, %v1208
        %v1355 = vadd.f32 %v842, %v1208
        %v1356 = vadd.f32 %v843, %v1208
        %v1357 = vadd.f32 %v844, %v1208
        %v1358 = vadd.f32 %v845, %v1208
        %v1359 = vadd.f32 %v846, %v1208
        %v1360 = vadd.f32 %v847, %v1208
        %v1361 = vadd.f32 %v848, %v1208
        %v1362 = vadd.f32 %v849, %v1208
        %v1363 = vadd.f32 %v850, %v1208
        %v1364 = vadd.f32 %v851, %v1208
        %v1365 = vadd.f32 %v852, %v1208
        %v1366 = vadd.f32 %v853, %v1208
        %v1367 = vadd.f32 %v854, %v1208
        %v1368 = vadd.f32 %v855, %v1208
        %v1369 = vadd.f32 %v856, %v1208
        %v1370 = vadd.f32 %v857, %v1208
        %v1371 = vadd.f32 %v858, %v1208
        %v1372 = vadd.f32 %v859, %v1208
        %v1373 = vadd.f32 %v860, %v1208
        %v1374 = vadd.f32 %v861, %v1208
        %v1375 = vadd.f32 %v862, %v1208
        %v1376 = vadd.f32 %v863, %v1208
        %v1377 = vadd.f32 %v864, %v1208
        %v1378 = vadd.f32 %v865, %v1208
        %v1379 = vadd.f32 %v866, %v1208
        %v1380 = vadd.f32 %v867, %v1208
        %v1381 = vadd.f32 %v868, %v1208
        %v1382 = vadd.f32 %v869, %v1208
        %v1383 = vadd.f32 %v870, %v1208
        %v1384 = vadd.f32 %v871, %v1208
        %v1385 = vadd.f32 %v872, %v1208
        %v1386 = vadd.f32 %v873, %v1208
        %v1387 = vadd.f32 %v874, %v1208
        %v1388 = vadd.f32 %v875, %v1208
        %v1389 = vadd.f32 %v876, %v1208
        %v1390 = vadd.f32 %v877, %v1208
        %v1391 = vadd.f32 %v878, %v1208
        %v1392 = vadd.f32 %v879, %v1208
        %v1393 = vadd.f32 %v880, %v1208
        %v1394 = vadd.f32 %v881, %v1208
        %v1395 = vadd.f32 %v882, %v1208
        %v1396 = vadd.f32 %v883, %v1208
        %v1397 = vadd.f32 %v884, %v1208
        %v1398 = vadd.f32 %v885, %v1208
        %v1399 = vadd.f32 %v886, %v1208
        %v1400 = vadd.f32 %v887, %v1208
        %v1401 = vadd.f32 %v888, %v1208
        %v1402 = vadd.f32 %v889, %v1208
        %v1403 = vadd.f32 %v890, %v1208
        %v1404 = vadd.f32 %v891, %v1208
        %v1405 = vadd.f32 %v892, %v1208
        %v1406 = vadd.f32 %v893, %v1208
        %v1407 = vadd.f32 %v894, %v1208
        %v1408 = vadd.f32 %v895, %v1208
        %v1409 = vadd.f32 %v896, %v1208
        %v1410 = vadd.f32 %v897, %v1208
        %v1411 = vadd.f32 %v898, %v1208
        %v1412 = vadd.f32 %v899, %v1208
        %v1413 = vadd.f32 %v900, %v1208
        %v1414 = vadd.f32 %v901, %v1208
        %v1415 = vadd.f32 %v902, %v1208
        %v1416 = vadd.f32 %v903, %v1208
        %v1417 = vadd.f32 %v904, %v1208
        %v1418 = vadd.f32 %v905, %v1208
        %v1419 = vadd.f32 %v906, %v1208
        %v1420 = vadd.f32 %v907, %v1208
        %v1421 = vadd.f32 %v908, %v1208
        %v1422 = vadd.f32 %v909, %v1208
        %v1423 = vadd.f32 %v910, %v1208
        %v1424 = vadd.f32 %v911, %v1208
        %v1425 = vadd.f32 %v912, %v1208
        %v1426 = vadd.f32 %v913, %v1208
        %v1427 = vadd.f32 %v914, %v1208
        %v1428 = vadd.f32 %v915, %v1208
        %v1429 = vadd.f32 %v916, %v1208
        %v1430 = vadd.f32 %v917, %v1208
        %v1431 = vadd.f32 %v918, %v1208
        %v1432 = vadd.f32 %v919, %v1208
        %v1433 = vadd.f32 %v920, %v1208
        %v1434 = vadd.f32 %v921, %v1208
        %v1435 = vadd.f32 %v922, %v1208
        %v1436 = vadd.f32 %v923, %v1208
        %v1437 = vadd.f32 %v924, %v1208
        %v1438 = vadd.f32 %v925, %v1208
        %v1439 = vadd.f32 %v926, %v1208
        %v1440 = vadd.f32 %v927, %v1208
        %v1441 = vadd.f32 %v928, %v1208
        %v1442 = vadd.f32 %v929, %v1208
        %v1443 = vadd.f32 %v930, %v1208
        %v1444 = vadd.f32 %v931, %v1208
        %v1445 = vadd.f32 %v932, %v1208
        %v1446 = vadd.f32 %v933, %v1208
        %v1447 = vadd.f32 %v934, %v1208
        %v1448 = vadd.f32 %v935, %v1208
        %v1449 = vadd.f32 %v936, %v1208
        %v1450 = vadd.f32 %v937, %v1208
        %v1451 = vadd.f32 %v938, %v1208
        %v1452 = vadd.f32 %v939, %v1208
        %v1453 = vadd.f32 %v940, %v1208
        %v1454 = vadd.f32 %v941, %v1208
        %v1455 = vadd.f32 %v942, %v1208
        %v1456 = vadd.f32 %v943, %v1208
        %v1457 = vadd.f32 %v944, %v1208
        %v1458 = vadd.f32 %v945, %v1208
        %v1459 = vadd.f32 %v946, %v1208
        %v1460 = vadd.f32 %v947, %v1208
        %v1461 = vadd.f32 %v948, %v1208
        %v1462 = vadd.f32 %v949, %v1208
        %v1463 = vadd.f32 %v950, %v1208
        %v1464 = vadd.f32 %v951, %v1208
        %v1465 = vadd.f32 %v952, %v1208
        %v1466 = vadd.f32 %v953, %v1208
        %v1467 = vadd.f32 %v954, %v1208
        %v1468 = vadd.f32 %v955, %v1208
        %v1469 = vadd.f32 %v956, %v1208
        %v1470 = vadd.f32 %v957, %v1208
        %v1471 = vadd.f32 %v958, %v1208
        %v1472 = vadd.f32 %v959, %v1208
        %v1473 = vadd.f32 %v960, %v1208
        %v1474 = vadd.f32 %v961, %v1208
        %v1475 = vadd.f32 %v962, %v1208
        %v1476 = vadd.f32 %v963, %v1208
        %v1477 = vadd.f32 %v964, %v1208
        %v1478 = vadd.f32 %v965, %v1208
        %v1479 = vadd.f32 %v966, %v1208
        %v1480 = vadd.f32 %v967, %v1208
        %v1481 = vadd.f32 %v968, %v1208
        %v1482 = vadd.f32 %v969, %v1208
        %v1483 = vadd.f32 %v970, %v1208
        %v1484 = vadd.f32 %v971, %v1208
        %v1485 = vadd.f32 %v972, %v1208
        %v1486 = vadd.f32 %v973, %v1208
        %v1487 = vadd.f32 %v974, %v1208
        %v1488 = vadd.f32 %v975, %v1208
        %v1489 = vadd.f32 %v976, %v1208
        %v1490 = vadd.f32 %v977, %v1208
        %v1491 = vadd.f32 %v978, %v1208
        %v1492 = vadd.f32 %v979, %v1208
        %v1493 = vadd.f32 %v980, %v1208
        %v1494 = vadd.f32 %v981, %v1208
        %v1495 = vadd.f32 %v982, %v1208
        %v1496 = vadd.f32 %v983, %v1208
        %v1497 = vadd.f32 %v984, %v1208
        %v1498 = vadd.f32 %v985, %v1208
        %v1499 = vadd.f32 %v986, %v1208
        %v1500 = vadd.f32 %v987, %v1208
        %v1501 = vadd.f32 %v988, %v1208
        %v1502 = vadd.f32 %v989, %v1208
        %v1503 = vadd.f32 %v990, %v1208
        %v1504 = vadd.f32 %v991, %v1208
        %v1505 = vadd.f32 %v992, %v1208
        %v1506 = vadd.f32 %v993, %v1208
        %v1507 = vadd.f32 %v994, %v1208
        %v1508 = vadd.f32 %v995, %v1208
        %v1509 = vadd.f32 %v996, %v1208
        %v1510 = vadd.f32 %v997, %v1208
        %v1511 = vadd.f32 %v998, %v1208
        %v1512 = vadd.f32 %v999, %v1208
        %v1513 = vadd.f32 %v1000, %v1208
        %v1514 = vadd.f32 %v1001, %v1208
        %v1515 = vadd.f32 %v1002, %v1208
        %v1516 = vadd.f32 %v1003, %v1208
        %v1517 = vadd.f32 %v1004, %v1208
        %v1518 = vadd.f32 %v1005, %v1208
        %v1519 = vadd.f32 %v1006, %v1208
        %v1520 = vadd.f32 %v1007, %v1208
        %v1521 = vadd.f32 %v1008, %v1208
        %v1522 = vadd.f32 %v1009, %v1208
        %v1523 = vadd.f32 %v1010, %v1208
        %v1524 = vadd.f32 %v1011, %v1208
        %v1525 = vadd.f32 %v1012, %v1208
        %v1526 = vadd.f32 %v1013, %v1208
        %v1527 = vadd.f32 %v1014, %v1208
        %v1528 = vadd.f32 %v1015, %v1208
        %v1529 = vadd.f32 %v1016, %v1208
        %v1530 = vadd.f32 %v1017, %v1208
        %v1531 = vadd.f32 %v1018, %v1208
        %v1532 = vadd.f32 %v1019, %v1208
        %v1533 = vadd.f32 %v1020, %v1208
        %v1534 = vadd.f32 %v1021, %v1208
        %v1535 = vadd.f32 %v1022, %v1208
        %v1536 = vadd.f32 %v1023, %v1208
        %v1537 = vadd.f32 %v1024, %v1208
        %v1538 = vadd.f32 %v1025, %v1208
        %v1539 = vadd.f32 %v1026, %v1208
        %v1540 = vadd.f32 %v1027, %v1208
        %v1541 = vadd.f32 %v1028, %v1208
        %v1542 = vadd.f32 %v1029, %v1208
        %v1543 = vadd.f32 %v1030, %v1208
        %v1544 = vadd.f32 %v1031, %v1208
        %v1545 = vadd.f32 %v1032, %v1208
        %v1546 = vadd.f32 %v1033, %v1208
        %v1547 = vadd.f32 %v1034, %v1208
        %v1548 = vadd.f32 %v1035, %v1208
        %v1549 = vadd.f32 %v1036, %v1208
        %v1550 = vadd.f32 %v1037, %v1208
        %v1551 = vadd.f32 %v1038, %v1208
        %v1552 = vadd.f32 %v1039, %v1208
        %v1553 = vadd.f32 %v1040, %v1208
        %v1554 = vadd.f32 %v1041, %v1208
        %v1555 = vadd.f32 %v1042, %v1208
        %v1556 = vadd.f32 %v1043, %v1208
        %v1557 = vadd.f32 %v1044, %v1208
        %v1558 = vadd.f32 %v1045, %v1208
        %v1559 = vadd.f32 %v1046, %v1208
        %v1560 = vadd.f32 %v1047, %v1208
        %v1561 = vadd.f32 %v1048, %v1208
        %v1562 = vadd.f32 %v1049, %v1208
        %v1563 = vadd.f32 %v1050, %v1208
        %v1564 = vadd.f32 %v1051, %v1208
        %v1565 = vadd.f32 %v1052, %v1208
        %v1566 = vadd.f32 %v1053, %v1208
        %v1567 = vadd.f32 %v1054, %v1208
        %v1568 = vadd.f32 %v1055, %v1208
        %v1569 = vadd.f32 %v1056, %v1208
        %v1570 = vadd.f32 %v1057, %v1208
        %v1571 = vadd.f32 %v1058, %v1208
        %v1572 = vadd.f32 %v1059, %v1208
        %v1573 = vadd.f32 %v1060, %v1208
        %v1574 = vadd.f32 %v1061, %v1208
        %v1575 = vadd.f32 %v1062, %v1208
        %v1576 = vadd.f32 %v1063, %v1208
        %v1577 = vadd.f32 %v1064, %v1208
        %v1578 = vadd.f32 %v1065, %v1208
        %v1579 = vadd.f32 %v1066, %v1208
        %v1580 = vadd.f32 %v1067, %v1208
        %v1581 = vadd.f32 %v1068, %v1208
        %v1582 = vadd.f32 %v1069, %v1208
        %v1583 = vadd.f32 %v1070, %v1208
        %v1584 = vadd.f32 %v1071, %v1208
        %v1585 = vadd.f32 %v1072, %v1208
        %v1586 = vadd.f32 %v1073, %v1208
        %v1587 = vadd.f32 %v1074, %v1208
        %v1588 = vadd.f32 %v1075, %v1208
        %v1589 = vadd.f32 %v1076, %v1208
        %v1590 = vadd.f32 %v1077, %v1208
        %v1591 = vadd.f32 %v1078, %v1208
        %v1592 = vadd.f32 %v1079, %v1208
        %v1593 = vadd.f32 %v1080, %v1208
        %v1594 = vadd.f32 %v1081, %v1208
        %v1595 = vadd.f32 %v1082, %v1208
        %v1596 = vadd.f32 %v1083, %v1208
        %v1597 = vadd.f32 %v1084, %v1208
        %v1598 = vadd.f32 %v1085, %v1208
        %v1599 = vadd.f32 %v1086, %v1208
        %v1600 = vadd.f32 %v1087, %v1208
        %v1601 = vadd.f32 %v1088, %v1208
        %v1602 = vadd.f32 %v1089, %v1208
        %v1603 = vadd.f32 %v1090, %v1208
        %v1604 = vadd.f32 %v1091, %v1208
        %v1605 = vadd.f32 %v1092, %v1208
        %v1606 = vadd.f32 %v1093, %v1208
        %v1607 = vadd.f32 %v1094, %v1208
        %v1608 = vadd.f32 %v1095, %v1208
        %v1609 = vadd.f32 %v1096, %v1208
        %v1610 = vadd.f32 %v1097, %v1208
        %v1611 = vadd.f32 %v1098, %v1208
        %v1612 = vadd.f32 %v1099, %v1208
        %v1613 = vadd.f32 %v1100, %v1208
        %v1614 = vadd.f32 %v1101, %v1208
        %v1615 = vadd.f32 %v1102, %v1208
        %v1616 = vadd.f32 %v1103, %v1208
        %v1617 = vadd.f32 %v1104, %v1208
        %v1618 = vadd.f32 %v1105, %v1208
        %v1619 = vadd.f32 %v1106, %v1208
        %v1620 = vadd.f32 %v1107, %v1208
        %v1621 = vadd.f32 %v1108, %v1208
        %v1622 = vadd.f32 %v1109, %v1208
        %v1623 = vadd.f32 %v1110, %v1208
        %v1624 = vadd.f32 %v1111, %v1208
        %v1625 = vadd.f32 %v1112, %v1208
        %v1626 = vadd.f32 %v1113, %v1208
        %v1627 = vadd.f32 %v1114, %v1208
        %v1628 = vadd.f32 %v1115, %v1208
        %v1629 = vadd.f32 %v1116, %v1208
        %v1630 = vadd.f32 %v1117, %v1208
        %v1631 = vadd.f32 %v1118, %v1208
        %v1632 = vadd.f32 %v1119, %v1208
        %v1633 = vadd.f32 %v1120, %v1208
        %v1634 = vadd.f32 %v1121, %v1208
        %v1635 = vadd.f32 %v1122, %v1208
        %v1636 = vadd.f32 %v1123, %v1208
        %v1637 = vadd.f32 %v1124, %v1208
        %v1638 = vadd.f32 %v1125, %v1208
        %v1639 = vadd.f32 %v1126, %v1208
        %v1640 = vadd.f32 %v1127, %v1208
        %v1641 = vadd.f32 %v1128, %v1208
        %v1642 = vadd.f32 %v1129, %v1208
        %v1643 = vadd.f32 %v1130, %v1208
        %v1644 = vadd.f32 %v1131, %v1208
        %v1645 = vadd.f32 %v1132, %v1208
        %v1646 = vadd.f32 %v1133, %v1208
        %v1647 = vadd.f32 %v1134, %v1208
        %v1648 = vadd.f32 %v1135, %v1208
        %v1649 = vadd.f32 %v1136, %v1208
        %v1650 = vadd.f32 %v1137, %v1208
        %v1651 = vadd.f32 %v1138, %v1208
        %v1652 = vadd.f32 %v1139, %v1208
        %v1653 = vadd.f32 %v1140, %v1208
        %v1654 = vadd.f32 %v1141, %v1208
        %v1655 = vadd.f32 %v1142, %v1208
        %v1656 = vadd.f32 %v1143, %v1208
        %v1657 = vadd.f32 %v1144, %v1208
        %v1658 = vadd.f32 %v1145, %v1208
        %v1659 = vadd.f32 %v1146, %v1208
        %v1660 = vadd.f32 %v1147, %v1208
        %v1661 = vadd.f32 %v1148, %v1208
        %v1662 = vadd.f32 %v1149, %v1208
        %v1663 = vadd.f32 %v1150, %v1208
        %v1664 = vadd.f32 %v1151, %v1208
        %v1665 = vadd.f32 %v1152, %v1208
        %v1666 = vadd.f32 %v1153, %v1208
        %v1667 = vadd.f32 %v1154, %v1208
        %v1668 = vadd.f32 %v1155, %v1208
        %v1669 = vadd.f32 %v1156, %v1208
        %v1670 = vadd.f32 %v1157, %v1208
        %v1671 = vadd.f32 %v1158, %v1208
        %v1672 = vadd.f32 %v1159, %v1208
        %v1673 = vadd.f32 %v1160, %v1208
        %v1674 = vadd.f32 %v1161, %v1208
        %v1675 = vadd.f32 %v1162, %v1208
        %v1676 = vadd.f32 %v1163, %v1208
        %v1677 = vadd.f32 %v1164, %v1208
        %v1678 = vadd.f32 %v1165, %v1208
        %v1679 = vadd.f32 %v1166, %v1208
        %v1680 = vadd.f32 %v1167, %v1208
        %v1681 = vadd.f32 %v1168, %v1208
        %v1682 = vadd.f32 %v1169, %v1208
        %v1683 = vadd.f32 %v1170, %v1208
        %v1684 = vadd.f32 %v1171, %v1208
        %v1685 = vadd.f32 %v1172, %v1208
        %v1686 = vadd.f32 %v1173, %v1208
        %v1687 = vadd.f32 %v1174, %v1208
        %v1688 = vadd.f32 %v1175, %v1208
        %v1689 = vadd.f32 %v1176, %v1208
        %v1690 = vadd.f32 %v1177, %v1208
        %v1691 = vadd.f32 %v1178, %v1208
        %v1692 = vadd.f32 %v1179, %v1208
        %v1693 = vadd.f32 %v1180, %v1208
        %v1694 = vadd.f32 %v1181, %v1208
        %v1695 = vadd.f32 %v1182, %v1208
        %v1696 = vadd.f32 %v1183, %v1208
        %v1697 = vadd.f32 %v1184, %v1208
        %v1698 = vadd.f32 %v1185, %v1208
        %v1699 = vadd.f32 %v1186, %v1208
        %v1700 = vadd.f32 %v1187, %v1208
        %v1701 = vadd.f32 %v1188, %v1208
        %v1702 = vadd.f32 %v1189, %v1208
        %v1703 = vadd.f32 %v1190, %v1208
        %v1704 = vadd.f32 %v1191, %v1208
        %v1705 = vadd.f32 %v1192, %v1208
        %v1706 = vadd.f32 %v1193, %v1208
        %v1707 = vadd.f32 %v1194, %v1208
        %v1708 = vadd.f32 %v1195, %v1208
        %v1709 = vadd.f32 %v1196, %v1208
        %v1710 = vadd.f32 %v1197, %v1208
        %v1711 = vadd.f32 %v1198, %v1208
        %v1712 = vadd.f32 %v1199, %v1208
        %v1713 = vadd.f32 %v1200, %v1208
        %v1714 = vadd.f32 %v1201, %v1208
        %v1715 = vadd.f32 %v1202, %v1208
        %v1716 = vadd.f32 %v1203, %v1208
        %v1717 = vadd.f32 %v1204, %v1208
        %v1718 = vadd.f32 %v1205, %v1208
        %v1719 = vadd.f32 %v1206, %v1208
        %v1720 = vadd.f32 %v1207, %v1208
        %1721 = vst [vmem:[%s178] sm:$0xff] %v1209
        %1722 = vst [vmem:[%s178 + $0x8] sm:$0xff] %v1210
        %1723 = vst [vmem:[%s178 + $0x10] sm:$0xff] %v1211
        %1724 = vst [vmem:[%s178 + $0x18] sm:$0xff] %v1212
        %1725 = vst [vmem:[%s178 + $0x20] sm:$0xff] %v1213
        %1726 = vst [vmem:[%s178 + $0x28] sm:$0xff] %v1214
        %1727 = vst [vmem:[%s178 + $0x30] sm:$0xff] %v1215
        %1728 = vst [vmem:[%s178 + $0x38] sm:$0xff] %v1216
        %1729 = vst [vmem:[%s178 + $0x40] sm:$0xff] %v1217
        %1730 = vst [vmem:[%s178 + $0x48] sm:$0xff] %v1218
        %1731 = vst [vmem:[%s178 + $0x50] sm:$0xff] %v1219
        %1732 = vst [vmem:[%s178 + $0x58] sm:$0xff] %v1220
        %1733 = vst [vmem:[%s178 + $0x60] sm:$0xff] %v1221
        %1734 = vst [vmem:[%s178 + $0x68] sm:$0xff] %v1222
        %1735 = vst [vmem:[%s178 + $0x70] sm:$0xff] %v1223
        %1736 = vst [vmem:[%s178 + $0x78] sm:$0xff] %v1224
        %1737 = vst [vmem:[%s178 + $0x80] sm:$0xff] %v1225
        %1738 = vst [vmem:[%s178 + $0x88] sm:$0xff] %v1226
        %1739 = vst [vmem:[%s178 + $0x90] sm:$0xff] %v1227
        %1740 = vst [vmem:[%s178 + $0x98] sm:$0xff] %v1228
        %1741 = vst [vmem:[%s178 + $0xa0] sm:$0xff] %v1229
        %1742 = vst [vmem:[%s178 + $0xa8] sm:$0xff] %v1230
        %1743 = vst [vmem:[%s178 + $0xb0] sm:$0xff] %v1231
        %1744 = vst [vmem:[%s178 + $0xb8] sm:$0xff] %v1232
        %1745 = vst [vmem:[%s178 + $0xc0] sm:$0xff] %v1233
        %1746 = vst [vmem:[%s178 + $0xc8] sm:$0xff] %v1234
        %1747 = vst [vmem:[%s178 + $0xd0] sm:$0xff] %v1235
        %1748 = vst [vmem:[%s178 + $0xd8] sm:$0xff] %v1236
        %1749 = vst [vmem:[%s178 + $0xe0] sm:$0xff] %v1237
        %1750 = vst [vmem:[%s178 + $0xe8] sm:$0xff] %v1238
        %1751 = vst [vmem:[%s178 + $0xf0] sm:$0xff] %v1239
        %1752 = vst [vmem:[%s178 + $0xf8] sm:$0xff] %v1240
        %1753 = vst [vmem:[%s178 + $0x100] sm:$0xff] %v1241
        %1754 = vst [vmem:[%s178 + $0x108] sm:$0xff] %v1242
        %1755 = vst [vmem:[%s178 + $0x110] sm:$0xff] %v1243
        %1756 = vst [vmem:[%s178 + $0x118] sm:$0xff] %v1244
        %1757 = vst [vmem:[%s178 + $0x120] sm:$0xff] %v1245
        %1758 = vst [vmem:[%s178 + $0x128] sm:$0xff] %v1246
        %1759 = vst [vmem:[%s178 + $0x130] sm:$0xff] %v1247
        %1760 = vst [vmem:[%s178 + $0x138] sm:$0xff] %v1248
        %1761 = vst [vmem:[%s178 + $0x140] sm:$0xff] %v1249
        %1762 = vst [vmem:[%s178 + $0x148] sm:$0xff] %v1250
        %1763 = vst [vmem:[%s178 + $0x150] sm:$0xff] %v1251
        %1764 = vst [vmem:[%s178 + $0x158] sm:$0xff] %v1252
        %1765 = vst [vmem:[%s178 + $0x160] sm:$0xff] %v1253
        %1766 = vst [vmem:[%s178 + $0x168] sm:$0xff] %v1254
        %1767 = vst [vmem:[%s178 + $0x170] sm:$0xff] %v1255
        %1768 = vst [vmem:[%s178 + $0x178] sm:$0xff] %v1256
        %1769 = vst [vmem:[%s178 + $0x180] sm:$0xff] %v1257
        %1770 = vst [vmem:[%s178 + $0x188] sm:$0xff] %v1258
        %1771 = vst [vmem:[%s178 + $0x190] sm:$0xff] %v1259
        %1772 = vst [vmem:[%s178 + $0x198] sm:$0xff] %v1260
        %1773 = vst [vmem:[%s178 + $0x1a0] sm:$0xff] %v1261
        %1774 = vst [vmem:[%s178 + $0x1a8] sm:$0xff] %v1262
        %1775 = vst [vmem:[%s178 + $0x1b0] sm:$0xff] %v1263
        %1776 = vst [vmem:[%s178 + $0x1b8] sm:$0xff] %v1264
        %1777 = vst [vmem:[%s178 + $0x1c0] sm:$0xff] %v1265
        %1778 = vst [vmem:[%s178 + $0x1c8] sm:$0xff] %v1266
        %1779 = vst [vmem:[%s178 + $0x1d0] sm:$0xff] %v1267
        %1780 = vst [vmem:[%s178 + $0x1d8] sm:$0xff] %v1268
        %1781 = vst [vmem:[%s178 + $0x1e0] sm:$0xff] %v1269
        %1782 = vst [vmem:[%s178 + $0x1e8] sm:$0xff] %v1270
        %1783 = vst [vmem:[%s178 + $0x1f0] sm:$0xff] %v1271
        %1784 = vst [vmem:[%s178 + $0x1f8] sm:$0xff] %v1272
        %1785 = vst [vmem:[%s178 + $0x200] sm:$0xff] %v1273
        %1786 = vst [vmem:[%s178 + $0x208] sm:$0xff] %v1274
        %1787 = vst [vmem:[%s178 + $0x210] sm:$0xff] %v1275
        %1788 = vst [vmem:[%s178 + $0x218] sm:$0xff] %v1276
        %1789 = vst [vmem:[%s178 + $0x220] sm:$0xff] %v1277
        %1790 = vst [vmem:[%s178 + $0x228] sm:$0xff] %v1278
        %1791 = vst [vmem:[%s178 + $0x230] sm:$0xff] %v1279
        %1792 = vst [vmem:[%s178 + $0x238] sm:$0xff] %v1280
        %1793 = vst [vmem:[%s178 + $0x240] sm:$0xff] %v1281
        %1794 = vst [vmem:[%s178 + $0x248] sm:$0xff] %v1282
        %1795 = vst [vmem:[%s178 + $0x250] sm:$0xff] %v1283
        %1796 = vst [vmem:[%s178 + $0x258] sm:$0xff] %v1284
        %1797 = vst [vmem:[%s178 + $0x260] sm:$0xff] %v1285
        %1798 = vst [vmem:[%s178 + $0x268] sm:$0xff] %v1286
        %1799 = vst [vmem:[%s178 + $0x270] sm:$0xff] %v1287
        %1800 = vst [vmem:[%s178 + $0x278] sm:$0xff] %v1288
        %1801 = vst [vmem:[%s178 + $0x280] sm:$0xff] %v1289
        %1802 = vst [vmem:[%s178 + $0x288] sm:$0xff] %v1290
        %1803 = vst [vmem:[%s178 + $0x290] sm:$0xff] %v1291
        %1804 = vst [vmem:[%s178 + $0x298] sm:$0xff] %v1292
        %1805 = vst [vmem:[%s178 + $0x2a0] sm:$0xff] %v1293
        %1806 = vst [vmem:[%s178 + $0x2a8] sm:$0xff] %v1294
        %1807 = vst [vmem:[%s178 + $0x2b0] sm:$0xff] %v1295
        %1808 = vst [vmem:[%s178 + $0x2b8] sm:$0xff] %v1296
        %1809 = vst [vmem:[%s178 + $0x2c0] sm:$0xff] %v1297
        %1810 = vst [vmem:[%s178 + $0x2c8] sm:$0xff] %v1298
        %1811 = vst [vmem:[%s178 + $0x2d0] sm:$0xff] %v1299
        %1812 = vst [vmem:[%s178 + $0x2d8] sm:$0xff] %v1300
        %1813 = vst [vmem:[%s178 + $0x2e0] sm:$0xff] %v1301
        %1814 = vst [vmem:[%s178 + $0x2e8] sm:$0xff] %v1302
        %1815 = vst [vmem:[%s178 + $0x2f0] sm:$0xff] %v1303
        %1816 = vst [vmem:[%s178 + $0x2f8] sm:$0xff] %v1304
        %1817 = vst [vmem:[%s178 + $0x300] sm:$0xff] %v1305
        %1818 = vst [vmem:[%s178 + $0x308] sm:$0xff] %v1306
        %1819 = vst [vmem:[%s178 + $0x310] sm:$0xff] %v1307
        %1820 = vst [vmem:[%s178 + $0x318] sm:$0xff] %v1308
        %1821 = vst [vmem:[%s178 + $0x320] sm:$0xff] %v1309
        %1822 = vst [vmem:[%s178 + $0x328] sm:$0xff] %v1310
        %1823 = vst [vmem:[%s178 + $0x330] sm:$0xff] %v1311
        %1824 = vst [vmem:[%s178 + $0x338] sm:$0xff] %v1312
        %1825 = vst [vmem:[%s178 + $0x340] sm:$0xff] %v1313
        %1826 = vst [vmem:[%s178 + $0x348] sm:$0xff] %v1314
        %1827 = vst [vmem:[%s178 + $0x350] sm:$0xff] %v1315
        %1828 = vst [vmem:[%s178 + $0x358] sm:$0xff] %v1316
        %1829 = vst [vmem:[%s178 + $0x360] sm:$0xff] %v1317
        %1830 = vst [vmem:[%s178 + $0x368] sm:$0xff] %v1318
        %1831 = vst [vmem:[%s178 + $0x370] sm:$0xff] %v1319
        %1832 = vst [vmem:[%s178 + $0x378] sm:$0xff] %v1320
        %1833 = vst [vmem:[%s178 + $0x380] sm:$0xff] %v1321
        %1834 = vst [vmem:[%s178 + $0x388] sm:$0xff] %v1322
        %1835 = vst [vmem:[%s178 + $0x390] sm:$0xff] %v1323
        %1836 = vst [vmem:[%s178 + $0x398] sm:$0xff] %v1324
        %1837 = vst [vmem:[%s178 + $0x3a0] sm:$0xff] %v1325
        %1838 = vst [vmem:[%s178 + $0x3a8] sm:$0xff] %v1326
        %1839 = vst [vmem:[%s178 + $0x3b0] sm:$0xff] %v1327
        %1840 = vst [vmem:[%s178 + $0x3b8] sm:$0xff] %v1328
        %1841 = vst [vmem:[%s178 + $0x3c0] sm:$0xff] %v1329
        %1842 = vst [vmem:[%s178 + $0x3c8] sm:$0xff] %v1330
        %1843 = vst [vmem:[%s178 + $0x3d0] sm:$0xff] %v1331
        %1844 = vst [vmem:[%s178 + $0x3d8] sm:$0xff] %v1332
        %1845 = vst [vmem:[%s178 + $0x3e0] sm:$0xff] %v1333
        %1846 = vst [vmem:[%s178 + $0x3e8] sm:$0xff] %v1334
        %1847 = vst [vmem:[%s178 + $0x3f0] sm:$0xff] %v1335
        %1848 = vst [vmem:[%s178 + $0x3f8] sm:$0xff] %v1336
        %1849 = vst [vmem:[%s178 + $0x400] sm:$0xff] %v1337
        %1850 = vst [vmem:[%s178 + $0x408] sm:$0xff] %v1338
        %1851 = vst [vmem:[%s178 + $0x410] sm:$0xff] %v1339
        %1852 = vst [vmem:[%s178 + $0x418] sm:$0xff] %v1340
        %1853 = vst [vmem:[%s178 + $0x420] sm:$0xff] %v1341
        %1854 = vst [vmem:[%s178 + $0x428] sm:$0xff] %v1342
        %1855 = vst [vmem:[%s178 + $0x430] sm:$0xff] %v1343
        %1856 = vst [vmem:[%s178 + $0x438] sm:$0xff] %v1344
        %1857 = vst [vmem:[%s178 + $0x440] sm:$0xff] %v1345
        %1858 = vst [vmem:[%s178 + $0x448] sm:$0xff] %v1346
        %1859 = vst [vmem:[%s178 + $0x450] sm:$0xff] %v1347
        %1860 = vst [vmem:[%s178 + $0x458] sm:$0xff] %v1348
        %1861 = vst [vmem:[%s178 + $0x460] sm:$0xff] %v1349
        %1862 = vst [vmem:[%s178 + $0x468] sm:$0xff] %v1350
        %1863 = vst [vmem:[%s178 + $0x470] sm:$0xff] %v1351
        %1864 = vst [vmem:[%s178 + $0x478] sm:$0xff] %v1352
        %1865 = vst [vmem:[%s178 + $0x480] sm:$0xff] %v1353
        %1866 = vst [vmem:[%s178 + $0x488] sm:$0xff] %v1354
        %1867 = vst [vmem:[%s178 + $0x490] sm:$0xff] %v1355
        %1868 = vst [vmem:[%s178 + $0x498] sm:$0xff] %v1356
        %1869 = vst [vmem:[%s178 + $0x4a0] sm:$0xff] %v1357
        %1870 = vst [vmem:[%s178 + $0x4a8] sm:$0xff] %v1358
        %1871 = vst [vmem:[%s178 + $0x4b0] sm:$0xff] %v1359
        %1872 = vst [vmem:[%s178 + $0x4b8] sm:$0xff] %v1360
        %1873 = vst [vmem:[%s178 + $0x4c0] sm:$0xff] %v1361
        %1874 = vst [vmem:[%s178 + $0x4c8] sm:$0xff] %v1362
        %1875 = vst [vmem:[%s178 + $0x4d0] sm:$0xff] %v1363
        %1876 = vst [vmem:[%s178 + $0x4d8] sm:$0xff] %v1364
        %1877 = vst [vmem:[%s178 + $0x4e0] sm:$0xff] %v1365
        %1878 = vst [vmem:[%s178 + $0x4e8] sm:$0xff] %v1366
        %1879 = vst [vmem:[%s178 + $0x4f0] sm:$0xff] %v1367
        %1880 = vst [vmem:[%s178 + $0x4f8] sm:$0xff] %v1368
        %1881 = vst [vmem:[%s178 + $0x500] sm:$0xff] %v1369
        %1882 = vst [vmem:[%s178 + $0x508] sm:$0xff] %v1370
        %1883 = vst [vmem:[%s178 + $0x510] sm:$0xff] %v1371
        %1884 = vst [vmem:[%s178 + $0x518] sm:$0xff] %v1372
        %1885 = vst [vmem:[%s178 + $0x520] sm:$0xff] %v1373
        %1886 = vst [vmem:[%s178 + $0x528] sm:$0xff] %v1374
        %1887 = vst [vmem:[%s178 + $0x530] sm:$0xff] %v1375
        %1888 = vst [vmem:[%s178 + $0x538] sm:$0xff] %v1376
        %1889 = vst [vmem:[%s178 + $0x540] sm:$0xff] %v1377
        %1890 = vst [vmem:[%s178 + $0x548] sm:$0xff] %v1378
        %1891 = vst [vmem:[%s178 + $0x550] sm:$0xff] %v1379
        %1892 = vst [vmem:[%s178 + $0x558] sm:$0xff] %v1380
        %1893 = vst [vmem:[%s178 + $0x560] sm:$0xff] %v1381
        %1894 = vst [vmem:[%s178 + $0x568] sm:$0xff] %v1382
        %1895 = vst [vmem:[%s178 + $0x570] sm:$0xff] %v1383
        %1896 = vst [vmem:[%s178 + $0x578] sm:$0xff] %v1384
        %1897 = vst [vmem:[%s178 + $0x580] sm:$0xff] %v1385
        %1898 = vst [vmem:[%s178 + $0x588] sm:$0xff] %v1386
        %1899 = vst [vmem:[%s178 + $0x590] sm:$0xff] %v1387
        %1900 = vst [vmem:[%s178 + $0x598] sm:$0xff] %v1388
        %1901 = vst [vmem:[%s178 + $0x5a0] sm:$0xff] %v1389
        %1902 = vst [vmem:[%s178 + $0x5a8] sm:$0xff] %v1390
        %1903 = vst [vmem:[%s178 + $0x5b0] sm:$0xff] %v1391
        %1904 = vst [vmem:[%s178 + $0x5b8] sm:$0xff] %v1392
        %1905 = vst [vmem:[%s178 + $0x5c0] sm:$0xff] %v1393
        %1906 = vst [vmem:[%s178 + $0x5c8] sm:$0xff] %v1394
        %1907 = vst [vmem:[%s178 + $0x5d0] sm:$0xff] %v1395
        %1908 = vst [vmem:[%s178 + $0x5d8] sm:$0xff] %v1396
        %1909 = vst [vmem:[%s178 + $0x5e0] sm:$0xff] %v1397
        %1910 = vst [vmem:[%s178 + $0x5e8] sm:$0xff] %v1398
        %1911 = vst [vmem:[%s178 + $0x5f0] sm:$0xff] %v1399
        %1912 = vst [vmem:[%s178 + $0x5f8] sm:$0xff] %v1400
        %1913 = vst [vmem:[%s178 + $0x600] sm:$0xff] %v1401
        %1914 = vst [vmem:[%s178 + $0x608] sm:$0xff] %v1402
        %1915 = vst [vmem:[%s178 + $0x610] sm:$0xff] %v1403
        %1916 = vst [vmem:[%s178 + $0x618] sm:$0xff] %v1404
        %1917 = vst [vmem:[%s178 + $0x620] sm:$0xff] %v1405
        %1918 = vst [vmem:[%s178 + $0x628] sm:$0xff] %v1406
        %1919 = vst [vmem:[%s178 + $0x630] sm:$0xff] %v1407
        %1920 = vst [vmem:[%s178 + $0x638] sm:$0xff] %v1408
        %1921 = vst [vmem:[%s178 + $0x640] sm:$0xff] %v1409
        %1922 = vst [vmem:[%s178 + $0x648] sm:$0xff] %v1410
        %1923 = vst [vmem:[%s178 + $0x650] sm:$0xff] %v1411
        %1924 = vst [vmem:[%s178 + $0x658] sm:$0xff] %v1412
        %1925 = vst [vmem:[%s178 + $0x660] sm:$0xff] %v1413
        %1926 = vst [vmem:[%s178 + $0x668] sm:$0xff] %v1414
        %1927 = vst [vmem:[%s178 + $0x670] sm:$0xff] %v1415
        %1928 = vst [vmem:[%s178 + $0x678] sm:$0xff] %v1416
        %1929 = vst [vmem:[%s178 + $0x680] sm:$0xff] %v1417
        %1930 = vst [vmem:[%s178 + $0x688] sm:$0xff] %v1418
        %1931 = vst [vmem:[%s178 + $0x690] sm:$0xff] %v1419
        %1932 = vst [vmem:[%s178 + $0x698] sm:$0xff] %v1420
        %1933 = vst [vmem:[%s178 + $0x6a0] sm:$0xff] %v1421
        %1934 = vst [vmem:[%s178 + $0x6a8] sm:$0xff] %v1422
        %1935 = vst [vmem:[%s178 + $0x6b0] sm:$0xff] %v1423
        %1936 = vst [vmem:[%s178 + $0x6b8] sm:$0xff] %v1424
        %1937 = vst [vmem:[%s178 + $0x6c0] sm:$0xff] %v1425
        %1938 = vst [vmem:[%s178 + $0x6c8] sm:$0xff] %v1426
        %1939 = vst [vmem:[%s178 + $0x6d0] sm:$0xff] %v1427
        %1940 = vst [vmem:[%s178 + $0x6d8] sm:$0xff] %v1428
        %1941 = vst [vmem:[%s178 + $0x6e0] sm:$0xff] %v1429
        %1942 = vst [vmem:[%s178 + $0x6e8] sm:$0xff] %v1430
        %1943 = vst [vmem:[%s178 + $0x6f0] sm:$0xff] %v1431
        %1944 = vst [vmem:[%s178 + $0x6f8] sm:$0xff] %v1432
        %1945 = vst [vmem:[%s178 + $0x700] sm:$0xff] %v1433
        %1946 = vst [vmem:[%s178 + $0x708] sm:$0xff] %v1434
        %1947 = vst [vmem:[%s178 + $0x710] sm:$0xff] %v1435
        %1948 = vst [vmem:[%s178 + $0x718] sm:$0xff] %v1436
        %1949 = vst [vmem:[%s178 + $0x720] sm:$0xff] %v1437
        %1950 = vst [vmem:[%s178 + $0x728] sm:$0xff] %v1438
        %1951 = vst [vmem:[%s178 + $0x730] sm:$0xff] %v1439
        %1952 = vst [vmem:[%s178 + $0x738] sm:$0xff] %v1440
        %1953 = vst [vmem:[%s178 + $0x740] sm:$0xff] %v1441
        %1954 = vst [vmem:[%s178 + $0x748] sm:$0xff] %v1442
        %1955 = vst [vmem:[%s178 + $0x750] sm:$0xff] %v1443
        %1956 = vst [vmem:[%s178 + $0x758] sm:$0xff] %v1444
        %1957 = vst [vmem:[%s178 + $0x760] sm:$0xff] %v1445
        %1958 = vst [vmem:[%s178 + $0x768] sm:$0xff] %v1446
        %1959 = vst [vmem:[%s178 + $0x770] sm:$0xff] %v1447
        %1960 = vst [vmem:[%s178 + $0x778] sm:$0xff] %v1448
        %1961 = vst [vmem:[%s178 + $0x780] sm:$0xff] %v1449
        %1962 = vst [vmem:[%s178 + $0x788] sm:$0xff] %v1450
        %1963 = vst [vmem:[%s178 + $0x790] sm:$0xff] %v1451
        %1964 = vst [vmem:[%s178 + $0x798] sm:$0xff] %v1452
        %1965 = vst [vmem:[%s178 + $0x7a0] sm:$0xff] %v1453
        %1966 = vst [vmem:[%s178 + $0x7a8] sm:$0xff] %v1454
        %1967 = vst [vmem:[%s178 + $0x7b0] sm:$0xff] %v1455
        %1968 = vst [vmem:[%s178 + $0x7b8] sm:$0xff] %v1456
        %1969 = vst [vmem:[%s178 + $0x7c0] sm:$0xff] %v1457
        %1970 = vst [vmem:[%s178 + $0x7c8] sm:$0xff] %v1458
        %1971 = vst [vmem:[%s178 + $0x7d0] sm:$0xff] %v1459
        %1972 = vst [vmem:[%s178 + $0x7d8] sm:$0xff] %v1460
        %1973 = vst [vmem:[%s178 + $0x7e0] sm:$0xff] %v1461
        %1974 = vst [vmem:[%s178 + $0x7e8] sm:$0xff] %v1462
        %1975 = vst [vmem:[%s178 + $0x7f0] sm:$0xff] %v1463
        %1976 = vst [vmem:[%s178 + $0x7f8] sm:$0xff] %v1464
        %1977 = vst [vmem:[%s178 + $0x800] sm:$0xff] %v1465
        %1978 = vst [vmem:[%s178 + $0x808] sm:$0xff] %v1466
        %1979 = vst [vmem:[%s178 + $0x810] sm:$0xff] %v1467
        %1980 = vst [vmem:[%s178 + $0x818] sm:$0xff] %v1468
        %1981 = vst [vmem:[%s178 + $0x820] sm:$0xff] %v1469
        %1982 = vst [vmem:[%s178 + $0x828] sm:$0xff] %v1470
        %1983 = vst [vmem:[%s178 + $0x830] sm:$0xff] %v1471
        %1984 = vst [vmem:[%s178 + $0x838] sm:$0xff] %v1472
        %1985 = vst [vmem:[%s178 + $0x840] sm:$0xff] %v1473
        %1986 = vst [vmem:[%s178 + $0x848] sm:$0xff] %v1474
        %1987 = vst [vmem:[%s178 + $0x850] sm:$0xff] %v1475
        %1988 = vst [vmem:[%s178 + $0x858] sm:$0xff] %v1476
        %1989 = vst [vmem:[%s178 + $0x860] sm:$0xff] %v1477
        %1990 = vst [vmem:[%s178 + $0x868] sm:$0xff] %v1478
        %1991 = vst [vmem:[%s178 + $0x870] sm:$0xff] %v1479
        %1992 = vst [vmem:[%s178 + $0x878] sm:$0xff] %v1480
        %1993 = vst [vmem:[%s178 + $0x880] sm:$0xff] %v1481
        %1994 = vst [vmem:[%s178 + $0x888] sm:$0xff] %v1482
        %1995 = vst [vmem:[%s178 + $0x890] sm:$0xff] %v1483
        %1996 = vst [vmem:[%s178 + $0x898] sm:$0xff] %v1484
        %1997 = vst [vmem:[%s178 + $0x8a0] sm:$0xff] %v1485
        %1998 = vst [vmem:[%s178 + $0x8a8] sm:$0xff] %v1486
        %1999 = vst [vmem:[%s178 + $0x8b0] sm:$0xff] %v1487
        %2000 = vst [vmem:[%s178 + $0x8b8] sm:$0xff] %v1488
        %2001 = vst [vmem:[%s178 + $0x8c0] sm:$0xff] %v1489
        %2002 = vst [vmem:[%s178 + $0x8c8] sm:$0xff] %v1490
        %2003 = vst [vmem:[%s178 + $0x8d0] sm:$0xff] %v1491
        %2004 = vst [vmem:[%s178 + $0x8d8] sm:$0xff] %v1492
        %2005 = vst [vmem:[%s178 + $0x8e0] sm:$0xff] %v1493
        %2006 = vst [vmem:[%s178 + $0x8e8] sm:$0xff] %v1494
        %2007 = vst [vmem:[%s178 + $0x8f0] sm:$0xff] %v1495
        %2008 = vst [vmem:[%s178 + $0x8f8] sm:$0xff] %v1496
        %2009 = vst [vmem:[%s178 + $0x900] sm:$0xff] %v1497
        %2010 = vst [vmem:[%s178 + $0x908] sm:$0xff] %v1498
        %2011 = vst [vmem:[%s178 + $0x910] sm:$0xff] %v1499
        %2012 = vst [vmem:[%s178 + $0x918] sm:$0xff] %v1500
        %2013 = vst [vmem:[%s178 + $0x920] sm:$0xff] %v1501
        %2014 = vst [vmem:[%s178 + $0x928] sm:$0xff] %v1502
        %2015 = vst [vmem:[%s178 + $0x930] sm:$0xff] %v1503
        %2016 = vst [vmem:[%s178 + $0x938] sm:$0xff] %v1504
        %2017 = vst [vmem:[%s178 + $0x940] sm:$0xff] %v1505
        %2018 = vst [vmem:[%s178 + $0x948] sm:$0xff] %v1506
        %2019 = vst [vmem:[%s178 + $0x950] sm:$0xff] %v1507
        %2020 = vst [vmem:[%s178 + $0x958] sm:$0xff] %v1508
        %2021 = vst [vmem:[%s178 + $0x960] sm:$0xff] %v1509
        %2022 = vst [vmem:[%s178 + $0x968] sm:$0xff] %v1510
        %2023 = vst [vmem:[%s178 + $0x970] sm:$0xff] %v1511
        %2024 = vst [vmem:[%s178 + $0x978] sm:$0xff] %v1512
        %2025 = vst [vmem:[%s178 + $0x980] sm:$0xff] %v1513
        %2026 = vst [vmem:[%s178 + $0x988] sm:$0xff] %v1514
        %2027 = vst [vmem:[%s178 + $0x990] sm:$0xff] %v1515
        %2028 = vst [vmem:[%s178 + $0x998] sm:$0xff] %v1516
        %2029 = vst [vmem:[%s178 + $0x9a0] sm:$0xff] %v1517
        %2030 = vst [vmem:[%s178 + $0x9a8] sm:$0xff] %v1518
        %2031 = vst [vmem:[%s178 + $0x9b0] sm:$0xff] %v1519
        %2032 = vst [vmem:[%s178 + $0x9b8] sm:$0xff] %v1520
        %2033 = vst [vmem:[%s178 + $0x9c0] sm:$0xff] %v1521
        %2034 = vst [vmem:[%s178 + $0x9c8] sm:$0xff] %v1522
        %2035 = vst [vmem:[%s178 + $0x9d0] sm:$0xff] %v1523
        %2036 = vst [vmem:[%s178 + $0x9d8] sm:$0xff] %v1524
        %2037 = vst [vmem:[%s178 + $0x9e0] sm:$0xff] %v1525
        %2038 = vst [vmem:[%s178 + $0x9e8] sm:$0xff] %v1526
        %2039 = vst [vmem:[%s178 + $0x9f0] sm:$0xff] %v1527
        %2040 = vst [vmem:[%s178 + $0x9f8] sm:$0xff] %v1528
        %2041 = vst [vmem:[%s178 + $0xa00] sm:$0xff] %v1529
        %2042 = vst [vmem:[%s178 + $0xa08] sm:$0xff] %v1530
        %2043 = vst [vmem:[%s178 + $0xa10] sm:$0xff] %v1531
        %2044 = vst [vmem:[%s178 + $0xa18] sm:$0xff] %v1532
        %2045 = vst [vmem:[%s178 + $0xa20] sm:$0xff] %v1533
        %2046 = vst [vmem:[%s178 + $0xa28] sm:$0xff] %v1534
        %2047 = vst [vmem:[%s178 + $0xa30] sm:$0xff] %v1535
        %2048 = vst [vmem:[%s178 + $0xa38] sm:$0xff] %v1536
        %2049 = vst [vmem:[%s178 + $0xa40] sm:$0xff] %v1537
        %2050 = vst [vmem:[%s178 + $0xa48] sm:$0xff] %v1538
        %2051 = vst [vmem:[%s178 + $0xa50] sm:$0xff] %v1539
        %2052 = vst [vmem:[%s178 + $0xa58] sm:$0xff] %v1540
        %2053 = vst [vmem:[%s178 + $0xa60] sm:$0xff] %v1541
        %2054 = vst [vmem:[%s178 + $0xa68] sm:$0xff] %v1542
        %2055 = vst [vmem:[%s178 + $0xa70] sm:$0xff] %v1543
        %2056 = vst [vmem:[%s178 + $0xa78] sm:$0xff] %v1544
        %2057 = vst [vmem:[%s178 + $0xa80] sm:$0xff] %v1545
        %2058 = vst [vmem:[%s178 + $0xa88] sm:$0xff] %v1546
        %2059 = vst [vmem:[%s178 + $0xa90] sm:$0xff] %v1547
        %2060 = vst [vmem:[%s178 + $0xa98] sm:$0xff] %v1548
        %2061 = vst [vmem:[%s178 + $0xaa0] sm:$0xff] %v1549
        %2062 = vst [vmem:[%s178 + $0xaa8] sm:$0xff] %v1550
        %2063 = vst [vmem:[%s178 + $0xab0] sm:$0xff] %v1551
        %2064 = vst [vmem:[%s178 + $0xab8] sm:$0xff] %v1552
        %2065 = vst [vmem:[%s178 + $0xac0] sm:$0xff] %v1553
        %2066 = vst [vmem:[%s178 + $0xac8] sm:$0xff] %v1554
        %2067 = vst [vmem:[%s178 + $0xad0] sm:$0xff] %v1555
        %2068 = vst [vmem:[%s178 + $0xad8] sm:$0xff] %v1556
        %2069 = vst [vmem:[%s178 + $0xae0] sm:$0xff] %v1557
        %2070 = vst [vmem:[%s178 + $0xae8] sm:$0xff] %v1558
        %2071 = vst [vmem:[%s178 + $0xaf0] sm:$0xff] %v1559
        %2072 = vst [vmem:[%s178 + $0xaf8] sm:$0xff] %v1560
        %2073 = vst [vmem:[%s178 + $0xb00] sm:$0xff] %v1561
        %2074 = vst [vmem:[%s178 + $0xb08] sm:$0xff] %v1562
        %2075 = vst [vmem:[%s178 + $0xb10] sm:$0xff] %v1563
        %2076 = vst [vmem:[%s178 + $0xb18] sm:$0xff] %v1564
        %2077 = vst [vmem:[%s178 + $0xb20] sm:$0xff] %v1565
        %2078 = vst [vmem:[%s178 + $0xb28] sm:$0xff] %v1566
        %2079 = vst [vmem:[%s178 + $0xb30] sm:$0xff] %v1567
        %2080 = vst [vmem:[%s178 + $0xb38] sm:$0xff] %v1568
        %2081 = vst [vmem:[%s178 + $0xb40] sm:$0xff] %v1569
        %2082 = vst [vmem:[%s178 + $0xb48] sm:$0xff] %v1570
        %2083 = vst [vmem:[%s178 + $0xb50] sm:$0xff] %v1571
        %2084 = vst [vmem:[%s178 + $0xb58] sm:$0xff] %v1572
        %2085 = vst [vmem:[%s178 + $0xb60] sm:$0xff] %v1573
        %2086 = vst [vmem:[%s178 + $0xb68] sm:$0xff] %v1574
        %2087 = vst [vmem:[%s178 + $0xb70] sm:$0xff] %v1575
        %2088 = vst [vmem:[%s178 + $0xb78] sm:$0xff] %v1576
        %2089 = vst [vmem:[%s178 + $0xb80] sm:$0xff] %v1577
        %2090 = vst [vmem:[%s178 + $0xb88] sm:$0xff] %v1578
        %2091 = vst [vmem:[%s178 + $0xb90] sm:$0xff] %v1579
        %2092 = vst [vmem:[%s178 + $0xb98] sm:$0xff] %v1580
        %2093 = vst [vmem:[%s178 + $0xba0] sm:$0xff] %v1581
        %2094 = vst [vmem:[%s178 + $0xba8] sm:$0xff] %v1582
        %2095 = vst [vmem:[%s178 + $0xbb0] sm:$0xff] %v1583
        %2096 = vst [vmem:[%s178 + $0xbb8] sm:$0xff] %v1584
        %2097 = vst [vmem:[%s178 + $0xbc0] sm:$0xff] %v1585
        %2098 = vst [vmem:[%s178 + $0xbc8] sm:$0xff] %v1586
        %2099 = vst [vmem:[%s178 + $0xbd0] sm:$0xff] %v1587
        %2100 = vst [vmem:[%s178 + $0xbd8] sm:$0xff] %v1588
        %2101 = vst [vmem:[%s178 + $0xbe0] sm:$0xff] %v1589
        %2102 = vst [vmem:[%s178 + $0xbe8] sm:$0xff] %v1590
        %2103 = vst [vmem:[%s178 + $0xbf0] sm:$0xff] %v1591
        %2104 = vst [vmem:[%s178 + $0xbf8] sm:$0xff] %v1592
        %2105 = vst [vmem:[%s178 + $0xc00] sm:$0xff] %v1593
        %2106 = vst [vmem:[%s178 + $0xc08] sm:$0xff] %v1594
        %2107 = vst [vmem:[%s178 + $0xc10] sm:$0xff] %v1595
        %2108 = vst [vmem:[%s178 + $0xc18] sm:$0xff] %v1596
        %2109 = vst [vmem:[%s178 + $0xc20] sm:$0xff] %v1597
        %2110 = vst [vmem:[%s178 + $0xc28] sm:$0xff] %v1598
        %2111 = vst [vmem:[%s178 + $0xc30] sm:$0xff] %v1599
        %2112 = vst [vmem:[%s178 + $0xc38] sm:$0xff] %v1600
        %2113 = vst [vmem:[%s178 + $0xc40] sm:$0xff] %v1601
        %2114 = vst [vmem:[%s178 + $0xc48] sm:$0xff] %v1602
        %2115 = vst [vmem:[%s178 + $0xc50] sm:$0xff] %v1603
        %2116 = vst [vmem:[%s178 + $0xc58] sm:$0xff] %v1604
        %2117 = vst [vmem:[%s178 + $0xc60] sm:$0xff] %v1605
        %2118 = vst [vmem:[%s178 + $0xc68] sm:$0xff] %v1606
        %2119 = vst [vmem:[%s178 + $0xc70] sm:$0xff] %v1607
        %2120 = vst [vmem:[%s178 + $0xc78] sm:$0xff] %v1608
        %2121 = vst [vmem:[%s178 + $0xc80] sm:$0xff] %v1609
        %2122 = vst [vmem:[%s178 + $0xc88] sm:$0xff] %v1610
        %2123 = vst [vmem:[%s178 + $0xc90] sm:$0xff] %v1611
        %2124 = vst [vmem:[%s178 + $0xc98] sm:$0xff] %v1612
        %2125 = vst [vmem:[%s178 + $0xca0] sm:$0xff] %v1613
        %2126 = vst [vmem:[%s178 + $0xca8] sm:$0xff] %v1614
        %2127 = vst [vmem:[%s178 + $0xcb0] sm:$0xff] %v1615
        %2128 = vst [vmem:[%s178 + $0xcb8] sm:$0xff] %v1616
        %2129 = vst [vmem:[%s178 + $0xcc0] sm:$0xff] %v1617
        %2130 = vst [vmem:[%s178 + $0xcc8] sm:$0xff] %v1618
        %2131 = vst [vmem:[%s178 + $0xcd0] sm:$0xff] %v1619
        %2132 = vst [vmem:[%s178 + $0xcd8] sm:$0xff] %v1620
        %2133 = vst [vmem:[%s178 + $0xce0] sm:$0xff] %v1621
        %2134 = vst [vmem:[%s178 + $0xce8] sm:$0xff] %v1622
        %2135 = vst [vmem:[%s178 + $0xcf0] sm:$0xff] %v1623
        %2136 = vst [vmem:[%s178 + $0xcf8] sm:$0xff] %v1624
        %2137 = vst [vmem:[%s178 + $0xd00] sm:$0xff] %v1625
        %2138 = vst [vmem:[%s178 + $0xd08] sm:$0xff] %v1626
        %2139 = vst [vmem:[%s178 + $0xd10] sm:$0xff] %v1627
        %2140 = vst [vmem:[%s178 + $0xd18] sm:$0xff] %v1628
        %2141 = vst [vmem:[%s178 + $0xd20] sm:$0xff] %v1629
        %2142 = vst [vmem:[%s178 + $0xd28] sm:$0xff] %v1630
        %2143 = vst [vmem:[%s178 + $0xd30] sm:$0xff] %v1631
        %2144 = vst [vmem:[%s178 + $0xd38] sm:$0xff] %v1632
        %2145 = vst [vmem:[%s178 + $0xd40] sm:$0xff] %v1633
        %2146 = vst [vmem:[%s178 + $0xd48] sm:$0xff] %v1634
        %2147 = vst [vmem:[%s178 + $0xd50] sm:$0xff] %v1635
        %2148 = vst [vmem:[%s178 + $0xd58] sm:$0xff] %v1636
        %2149 = vst [vmem:[%s178 + $0xd60] sm:$0xff] %v1637
        %2150 = vst [vmem:[%s178 + $0xd68] sm:$0xff] %v1638
        %2151 = vst [vmem:[%s178 + $0xd70] sm:$0xff] %v1639
        %2152 = vst [vmem:[%s178 + $0xd78] sm:$0xff] %v1640
        %2153 = vst [vmem:[%s178 + $0xd80] sm:$0xff] %v1641
        %2154 = vst [vmem:[%s178 + $0xd88] sm:$0xff] %v1642
        %2155 = vst [vmem:[%s178 + $0xd90] sm:$0xff] %v1643
        %2156 = vst [vmem:[%s178 + $0xd98] sm:$0xff] %v1644
        %2157 = vst [vmem:[%s178 + $0xda0] sm:$0xff] %v1645
        %2158 = vst [vmem:[%s178 + $0xda8] sm:$0xff] %v1646
        %2159 = vst [vmem:[%s178 + $0xdb0] sm:$0xff] %v1647
        %2160 = vst [vmem:[%s178 + $0xdb8] sm:$0xff] %v1648
        %2161 = vst [vmem:[%s178 + $0xdc0] sm:$0xff] %v1649
        %2162 = vst [vmem:[%s178 + $0xdc8] sm:$0xff] %v1650
        %2163 = vst [vmem:[%s178 + $0xdd0] sm:$0xff] %v1651
        %2164 = vst [vmem:[%s178 + $0xdd8] sm:$0xff] %v1652
        %2165 = vst [vmem:[%s178 + $0xde0] sm:$0xff] %v1653
        %2166 = vst [vmem:[%s178 + $0xde8] sm:$0xff] %v1654
        %2167 = vst [vmem:[%s178 + $0xdf0] sm:$0xff] %v1655
        %2168 = vst [vmem:[%s178 + $0xdf8] sm:$0xff] %v1656
        %2169 = vst [vmem:[%s178 + $0xe00] sm:$0xff] %v1657
        %2170 = vst [vmem:[%s178 + $0xe08] sm:$0xff] %v1658
        %2171 = vst [vmem:[%s178 + $0xe10] sm:$0xff] %v1659
        %2172 = vst [vmem:[%s178 + $0xe18] sm:$0xff] %v1660
        %2173 = vst [vmem:[%s178 + $0xe20] sm:$0xff] %v1661
        %2174 = vst [vmem:[%s178 + $0xe28] sm:$0xff] %v1662
        %2175 = vst [vmem:[%s178 + $0xe30] sm:$0xff] %v1663
        %2176 = vst [vmem:[%s178 + $0xe38] sm:$0xff] %v1664
        %2177 = vst [vmem:[%s178 + $0xe40] sm:$0xff] %v1665
        %2178 = vst [vmem:[%s178 + $0xe48] sm:$0xff] %v1666
        %2179 = vst [vmem:[%s178 + $0xe50] sm:$0xff] %v1667
        %2180 = vst [vmem:[%s178 + $0xe58] sm:$0xff] %v1668
        %2181 = vst [vmem:[%s178 + $0xe60] sm:$0xff] %v1669
        %2182 = vst [vmem:[%s178 + $0xe68] sm:$0xff] %v1670
        %2183 = vst [vmem:[%s178 + $0xe70] sm:$0xff] %v1671
        %2184 = vst [vmem:[%s178 + $0xe78] sm:$0xff] %v1672
        %2185 = vst [vmem:[%s178 + $0xe80] sm:$0xff] %v1673
        %2186 = vst [vmem:[%s178 + $0xe88] sm:$0xff] %v1674
        %2187 = vst [vmem:[%s178 + $0xe90] sm:$0xff] %v1675
        %2188 = vst [vmem:[%s178 + $0xe98] sm:$0xff] %v1676
        %2189 = vst [vmem:[%s178 + $0xea0] sm:$0xff] %v1677
        %2190 = vst [vmem:[%s178 + $0xea8] sm:$0xff] %v1678
        %2191 = vst [vmem:[%s178 + $0xeb0] sm:$0xff] %v1679
        %2192 = vst [vmem:[%s178 + $0xeb8] sm:$0xff] %v1680
        %2193 = vst [vmem:[%s178 + $0xec0] sm:$0xff] %v1681
        %2194 = vst [vmem:[%s178 + $0xec8] sm:$0xff] %v1682
        %2195 = vst [vmem:[%s178 + $0xed0] sm:$0xff] %v1683
        %2196 = vst [vmem:[%s178 + $0xed8] sm:$0xff] %v1684
        %2197 = vst [vmem:[%s178 + $0xee0] sm:$0xff] %v1685
        %2198 = vst [vmem:[%s178 + $0xee8] sm:$0xff] %v1686
        %2199 = vst [vmem:[%s178 + $0xef0] sm:$0xff] %v1687
        %2200 = vst [vmem:[%s178 + $0xef8] sm:$0xff] %v1688
        %2201 = vst [vmem:[%s178 + $0xf00] sm:$0xff] %v1689
        %2202 = vst [vmem:[%s178 + $0xf08] sm:$0xff] %v1690
        %2203 = vst [vmem:[%s178 + $0xf10] sm:$0xff] %v1691
        %2204 = vst [vmem:[%s178 + $0xf18] sm:$0xff] %v1692
        %2205 = vst [vmem:[%s178 + $0xf20] sm:$0xff] %v1693
        %2206 = vst [vmem:[%s178 + $0xf28] sm:$0xff] %v1694
        %2207 = vst [vmem:[%s178 + $0xf30] sm:$0xff] %v1695
        %2208 = vst [vmem:[%s178 + $0xf38] sm:$0xff] %v1696
        %2209 = vst [vmem:[%s178 + $0xf40] sm:$0xff] %v1697
        %2210 = vst [vmem:[%s178 + $0xf48] sm:$0xff] %v1698
        %2211 = vst [vmem:[%s178 + $0xf50] sm:$0xff] %v1699
        %2212 = vst [vmem:[%s178 + $0xf58] sm:$0xff] %v1700
        %2213 = vst [vmem:[%s178 + $0xf60] sm:$0xff] %v1701
        %2214 = vst [vmem:[%s178 + $0xf68] sm:$0xff] %v1702
        %2215 = vst [vmem:[%s178 + $0xf70] sm:$0xff] %v1703
        %2216 = vst [vmem:[%s178 + $0xf78] sm:$0xff] %v1704
        %2217 = vst [vmem:[%s178 + $0xf80] sm:$0xff] %v1705
        %2218 = vst [vmem:[%s178 + $0xf88] sm:$0xff] %v1706
        %2219 = vst [vmem:[%s178 + $0xf90] sm:$0xff] %v1707
        %2220 = vst [vmem:[%s178 + $0xf98] sm:$0xff] %v1708
        %2221 = vst [vmem:[%s178 + $0xfa0] sm:$0xff] %v1709
        %2222 = vst [vmem:[%s178 + $0xfa8] sm:$0xff] %v1710
        %2223 = vst [vmem:[%s178 + $0xfb0] sm:$0xff] %v1711
        %2224 = vst [vmem:[%s178 + $0xfb8] sm:$0xff] %v1712
        %2225 = vst [vmem:[%s178 + $0xfc0] sm:$0xff] %v1713
        %2226 = vst [vmem:[%s178 + $0xfc8] sm:$0xff] %v1714
        %2227 = vst [vmem:[%s178 + $0xfd0] sm:$0xff] %v1715
        %2228 = vst [vmem:[%s178 + $0xfd8] sm:$0xff] %v1716
        %2229 = vst [vmem:[%s178 + $0xfe0] sm:$0xff] %v1717
        %2230 = vst [vmem:[%s178 + $0xfe8] sm:$0xff] %v1718
        %2231 = vst [vmem:[%s178 + $0xff0] sm:$0xff] %v1719
        %2232 = vst [vmem:[%s178 + $0xff8] sm:$0xff] %v1720
        %s2233 = sand.u32 %s75, 1
        %s2234 = scalar_lea.sflag [#allocation4], %s2233
        %s2235 = sand.u32 %s75, 1
        %s2236 = smul.addr %s2235, 4096
        %s2237 = scalar_lea.vmem [#allocation7], %s2236
        // Predicated region
        $region37: #{tpu_custom_call.1} parent=27 // pred_check
          %p2238 = pneg %p85
        $region38: #{tpu_custom_call.1} parent=27 // pred_check_branch
          %2240 = sbr.rel (%p2238) target = $region40
        $region39: #{tpu_custom_call.1} parent=27 // pred_region
          %s2241 = smul.u32 128, %s20
          %2243 = vsyncadd %s2234, 0
          %s2244 = smul.addr %s2241, 4
          %s2245 = smul.addr %s2244, 8
          %s2246 = scalar_lea.hbm %s2, %s2245
          %s2247 = sshll.u32 %s2237, 4
          %s2248 = int_to_ptr.vmem [resolvable:$true] %s2247
          %s2249 = sshll.u32 %s2246, 4
          %s2250 = int_to_ptr.hbm [resolvable:$true] %s2249
          %2255 = dma.vmem_to_hbm [thread:$0]  %s2248, 65536, %s2250, %s2234, 512, 512, 32
        $region40: #{tpu_custom_call.1} parent=27 // pred_fallthru
          _
      $region28: #{tpu_custom_call.1} parent=5 // pred_fallthru
        _
      %p2256 = scmp.le.s32.totalorder 2, %s15
      // Predicated region
      $region41: #{tpu_custom_call.1} parent=5 // pred_check
        %p2257 = pneg %p2256
      $region42: #{tpu_custom_call.1} parent=5 // pred_check_branch
        %2259 = sbr.rel (%p2257) target = $region44
      $region43: #{tpu_custom_call.1} parent=5 // pred_region
        %s2260 = ssub.s32 %s15, 2
        // Predicated region
        $region45: #{tpu_custom_call.1} parent=43 // pred_check
          %p2261 = pneg %p91
        $region46: #{tpu_custom_call.1} parent=43 // pred_check_branch
          %2263 = sbr.rel (%p2261) target = $region48
        $region47: #{tpu_custom_call.1} parent=43 // pred_region
          %s2264 = sand.u32 %s76, 1
          %s2265 = scalar_lea.sflag [#allocation4], %s2264
          %s2266 = sand.u32 %s76, 1
          %s2267 = smul.addr %s2266, 4096
          %s2268 = scalar_lea.vmem [#allocation7], %s2267
          %2270 = dma.done %s2265, 65536
        $region48: #{tpu_custom_call.1} parent=43 // pred_fallthru
          _
      $region44: #{tpu_custom_call.1} parent=5 // pred_fallthru
        _
    $region6: #{tpu_custom_call.1} parent=1 // loop_footer
      %s19 = sadd.s32 1, %s15
    $region7: #{tpu_custom_call.1} parent=1 // loop_footer_branch
      %14 = sbr.rel target = $region3
    $region8: #{tpu_custom_call.1} parent=1 // loop_exit
      _
    %2271 = vsyncpa [#allocation3], 1
    %s2272 = scalar_lea.sflag [#allocation3], 1
    %2273 = vsyncpa %s2272, 1
    %2274 = vsyncpa [#allocation4], 1
    %s2275 = scalar_lea.sflag [#allocation4], 1
    %2276 = vsyncpa %s2275, 1
    %2277 = vsyncpa [#allocation5], 1
    %s2278 = scalar_lea.sflag [#allocation5], 1
    %2279 = vsyncpa %s2278, 1

</llo_original>
